<compile_context>
chip_gen: v6e
topology: v6e:2x2x1
jax: 0.10.0
libtpu: 0.0.40
codegen_flags: <defaults>
</compile_context>

<pallas_src>
import functools

import jax
import jax.numpy as jnp
from jax.experimental import pallas as pl
from jax.experimental.pallas import tpu as pltpu


def _mean_mil_kernel(x_ref, w1_ref, b1_ref, o_ref, *, bt, nt, n_inst, inv_n):
    """Accumulate sum_over_instances(relu(x @ W1 + b1)) into o_ref (bt, H); scale by 1/N at the end."""
    ni = pl.program_id(1)                       # instance-tile index (reduction axis)
    n_last = pl.num_programs(1) - 1

    @pl.when(ni == 0)
    def _init():
        o_ref[...] = jnp.zeros_like(o_ref)

    rows = bt * nt
    d = x_ref.shape[-1]
    hdim = o_ref.shape[-1]

    # Cast to bf16 in-kernel (removes a standalone HBM cast pass over x).
    x = x_ref[...].reshape(rows, d).astype(jnp.bfloat16)         # (rows, D) bf16

    # Linear1 + bias + ReLU.  bf16 operands, f32 accumulation on the MXU.
    h = jnp.dot(x, w1_ref[...], preferred_element_type=jnp.float32)
    h = jnp.maximum(h + b1_ref[...], 0.0)                        # (rows, H) f32
    # Dropout is identity in eval mode.
    h = h.reshape(bt, nt, hdim)

    if n_inst % nt:
        # Ragged last instance tile: mask padded instances with a SELECT
        # (safe even if the out-of-bounds x rows produced NaN/Inf in h).
        inst = ni * nt + jax.lax.broadcasted_iota(jnp.int32, (bt, nt, hdim), 1)
        h = jnp.where(inst < n_inst, h, 0.0)

    # Mean-pooling accumulation on the VPU (no MXU weight re-push, no f32
    # (rows,H) round-trip through a second matmul).
    o_ref[...] += h.sum(axis=1)

    @pl.when(ni == n_last)
    def _finalize():
        o_ref[...] *= inv_n                                       # exact 1/N, once, in f32


def _choose_tiles(batch, n_inst, in_dim, target_rows=1024):
    """Pick (bag_tile, inst_tile): ~target_rows MXU rows / step, 16-aligned instance tiles."""
    # Keep the double-buffered f32 x tile <= ~8 MiB (v5e scoped-VMEM safe).
    target_rows = min(target_rows, max(64, (1 << 20) // max(in_dim, 1)))
    if batch <= 8:
        bt = batch                                   # full batch dim: always a legal block
    else:
        bt = next((d for d in (64, 32, 16, 8) if batch % d == 0), 8)
    budget = max(16, target_rows // bt)
    if n_inst <= budget:
        nt = n_inst                                  # full instance axis
    else:
        nt = max(16, (budget // 16) * 16)            # 16-aligned (bf16 sublane packing)
    return bt, nt


def mean_mil_forward(x, w1, b1, w2, b2, *, target_rows=1024, force_kernel=False):
    """x: (B, N, D) f32; w1: (D, H); b1: (1, H); w2: (H, C); b2: (1, C) -> (B, C)."""
    B, N, D = x.shape
    H = w1.shape[1]

    # Tiny-shape fallback: grid/DMA setup dominates below ~2K MXU rows.
    if not force_kernel and B * N < 2048:
        h = jnp.maximum(jnp.einsum("bnd,dh->bnh", x, w1) + b1[0], 0.0)
        return jnp.mean(h, axis=1) @ w2 + b2

    bt, nt = _choose_tiles(B, N, D, target_rows)
    n_tiles = pl.cdiv(N, nt)
    rows = bt * nt

    # Pad awkward batch sizes (rare) so the bag grid tiles evenly; padded bags
    # are independent rows and get sliced off the output.
    b_pad = pl.cdiv(B, bt) * bt
    x_in = jnp.pad(x, ((0, b_pad - B), (0, 0), (0, 0))) if b_pad != B else x

    # W1 as bf16 (tiny one-time cast; halves its DMA + MXU weight-push bytes).
    w1_bf = w1.astype(jnp.bfloat16)

    # Explicit VMEM budget with headroom (lets larger tiles compile everywhere).
    vmem_bytes = (
        2 * bt * nt * D * 4          # x f32 tile, double-buffered
        + 2 * D * H * 2              # W1 bf16
        + 2 * 8 * H * 4              # b1
        + 2 * max(bt, 8) * H * 4     # output block
        + rows * D * 2               # in-kernel bf16 copy of x
        + 2 * rows * H * 4           # h + masked temporaries
    )
    vmem_limit = max(32 << 20, min(int(vmem_bytes * 3 // 2) + (2 << 20), 56 << 20))

    cost = pl.CostEstimate(
        flops=2 * b_pad * n_tiles * nt * D * H + 3 * b_pad * n_tiles * nt * H,
        transcendentals=0,
        bytes_accessed=b_pad * N * D * 4 + D * H * 2 + H * 4 + b_pad * H * 4,
    )

    h_mean = pl.pallas_call(
        functools.partial(_mean_mil_kernel, bt=bt, nt=nt, n_inst=N, inv_n=1.0 / N),
        out_shape=jax.ShapeDtypeStruct((b_pad, H), jnp.float32),
        grid_spec=pltpu.PrefetchScalarGridSpec(
            num_scalar_prefetch=0,
            grid=(b_pad // bt, n_tiles),
            in_specs=[
                pl.BlockSpec((bt, nt, D), lambda b, n: (b, n, 0)),   # x tile (f32)
                pl.BlockSpec((D, H), lambda b, n: (0, 0)),           # W1 (resident)
                pl.BlockSpec((1, H), lambda b, n: (0, 0)),           # b1
            ],
            out_specs=pl.BlockSpec((bt, H), lambda b, n: (b, 0)),    # lane-dense f32 acc
        ),
        compiler_params=pltpu.CompilerParams(
            dimension_semantics=("parallel", "arbitrary"),
            vmem_limit_bytes=vmem_limit,
        ),
        cost_estimate=cost,
    )(x_in, w1_bf, b1)

    if b_pad != B:
        h_mean = h_mean[:B]

    # Tiny epilogue Linear2 (mean commutes with the affine map) in plain XLA.
    return jnp.dot(h_mean, w2, precision=jax.lax.Precision.HIGHEST) + b2


def init_params(key, in_dim, hidden, num_classes):
    """Deterministic xavier_normal weights, zero biases (matches initialize_weights)."""
    k1, k2 = jax.random.split(key)
    std1 = (2.0 / (in_dim + hidden)) ** 0.5
    std2 = (2.0 / (hidden + num_classes)) ** 0.5
    w1 = std1 * jax.random.normal(k1, (in_dim, hidden), jnp.float32)
    b1 = jnp.zeros((1, hidden), jnp.float32)
    w2 = std2 * jax.random.normal(k2, (hidden, num_classes), jnp.float32)
    b2 = jnp.zeros((1, num_classes), jnp.float32)
    return w1, b1, w2, b2


if __name__ == "__main__":
    # Small shapes consistent with the module: batch=2, in_dim=512 (module
    # default), hidden=512 (fixed by the module), num_classes=2, 72 instances
    # per bag so the ragged-tail / multi-tile reduction path is exercised.
    B, N, IN_DIM, HIDDEN, NUM_CLASSES = 2, 72, 512, 512, 2

    key = jax.random.PRNGKey(0)
    kx, kp = jax.random.split(key)
    x = jax.random.normal(kx, (B, N, IN_DIM), jnp.float32)
    w1, b1, w2, b2 = init_params(kp, IN_DIM, HIDDEN, NUM_CLASSES)

    # Pure-JAX reference with the same bf16 operand rounding as the kernel.
    xb = x.astype(jnp.bfloat16).astype(jnp.float32)
    w1b = w1.astype(jnp.bfloat16).astype(jnp.float32)
    hr = jnp.maximum(
        jnp.einsum("bnd,dh->bnh", xb, w1b, precision=jax.lax.Precision.HIGHEST) + b1[0], 0.0)
    ref = jnp.mean(
        jnp.einsum("bnh,hc->bnc", hr, w2, precision=jax.lax.Precision.HIGHEST) + b2[0], axis=1)

    # Run the Pallas kernel twice: once with a forced small instance tile
    # (multi-step reduction + ragged-tail masking), once with default tiling.
    fwd_small = jax.jit(functools.partial(mean_mil_forward, target_rows=64, force_kernel=True))
    fwd_default = jax.jit(functools.partial(mean_mil_forward, force_kernel=True))

    logits_a = fwd_small(x, w1, b1, w2, b2)
    logits_b = fwd_default(x, w1, b1, w2, b2)
    jax.block_until_ready((logits_a, logits_b))

    assert logits_a.shape == (B, NUM_CLASSES)
    assert logits_b.shape == (B, NUM_CLASSES)
    assert jnp.allclose(logits_a, ref, atol=2e-3, rtol=2e-3), float(
        jnp.max(jnp.abs(logits_a - ref)))
    assert jnp.allclose(logits_b, ref, atol=2e-3, rtol=2e-3), float(
        jnp.max(jnp.abs(logits_b - ref)))

    print("KERNEL_OK")
</pallas_src>

<mosaic_0001>
module attributes {stable_mosaic.version = 11 : i64} {
  func.func @_mean_mil_kernel(%arg0: i32, %arg1: i32, %arg2: memref<2x32x512xf32, #tpu.memory_space<vmem>>, %arg3: memref<512x512xbf16, #tpu.memory_space<vmem>>, %arg4: memref<1x512xf32, #tpu.memory_space<vmem>>, %arg5: memref<2x512xf32, #tpu.memory_space<vmem>>) attributes {dimension_semantics = [#tpu.dimension_semantics<parallel>, #tpu.dimension_semantics<arbitrary>], iteration_bounds = array<i64: 1, 3>, scalar_prefetch = 0 : i64, scratch_operands = 0 : i64, tpu.core_type = #tpu.core_type<tc>, window_params = [{transform_indices = @transform_0, window_bounds = array<i64: 2, 32, 512>}, {pipeline_mode = #tpu.pipeline_mode<synchronous>, transform_indices = @transform_1, window_bounds = array<i64: 512, 512>}, {pipeline_mode = #tpu.pipeline_mode<synchronous>, transform_indices = @transform_2, window_bounds = array<i64: 1, 512>}, {transform_indices = @transform_3, window_bounds = array<i64: 2, 512>}]} {
    %c0_i32 = arith.constant 0 : i32
    %0 = arith.cmpi eq, %arg1, %c0_i32 : i32
    %1 = arith.extui %0 : i1 to i32
    %c0_i32_0 = arith.constant 0 : i32
    %2 = arith.cmpi ne, %1, %c0_i32_0 : i32
    scf.if %2 {
      %cst_15 = arith.constant 0.000000e+00 : f32
      %29 = vector.broadcast %cst_15 : f32 to vector<2x512xf32>
      %c0_16 = arith.constant 0 : index
      %c0_17 = arith.constant 0 : index
      %30 = vector.load %arg5[%c0_16, %c0_17] : memref<2x512xf32, #tpu.memory_space<vmem>>, vector<2x512xf32>
      tpu.vector_store %arg5[%c0_16, %c0_17], %29 {strides = array<i32>} : memref<2x512xf32, #tpu.memory_space<vmem>>, vector<2x512xf32>,
    } else {
    }
    %c0 = arith.constant 0 : index
    %c0_1 = arith.constant 0 : index
    %c0_2 = arith.constant 0 : index
    %3 = vector.load %arg2[%c0, %c0_1, %c0_2] : memref<2x32x512xf32, #tpu.memory_space<vmem>>, vector<2x32x512xf32>
    %4 = vector.shape_cast %3 : vector<2x32x512xf32> to vector<64x512xf32>
    %5 = arith.truncf %4 : vector<64x512xf32> to vector<64x512xbf16>
    %c0_3 = arith.constant 0 : index
    %c0_4 = arith.constant 0 : index
    %6 = vector.load %arg3[%c0_3, %c0_4] : memref<512x512xbf16, #tpu.memory_space<vmem>>, vector<512x512xbf16>
    %cst = arith.constant dense<0.000000e+00> : vector<64x512xf32>
    %7 = tpu.matmul %5, %6, %cst {dimension_numbers = #tpu.dot_dimension_numbers<[1], [0], [0], [1], [0, 0, 1, 1], [], []>} : vector<64x512xbf16>, vector<512x512xbf16>, vector<64x512xf32> -> vector<64x512xf32>
    %c0_5 = arith.constant 0 : index
    %c0_6 = arith.constant 0 : index
    %8 = vector.load %arg4[%c0_5, %c0_6] : memref<1x512xf32, #tpu.memory_space<vmem>>, vector<1x512xf32>
    %9 = vector.broadcast %8 : vector<1x512xf32> to vector<64x512xf32>
    %10 = arith.addf %7, %9 : vector<64x512xf32>
    %cst_7 = arith.constant 0.000000e+00 : f32
    %11 = vector.broadcast %cst_7 : f32 to vector<64x512xf32>
    %12 = arith.maximumf %10, %11 : vector<64x512xf32>
    %13 = vector.shape_cast %12 : vector<64x512xf32> to vector<2x32x512xf32>
    %c32_i32 = arith.constant 32 : i32
    %14 = arith.muli %arg1, %c32_i32 : i32
    %15 = tpu.iota {dimensions = array<i32: 1>} : vector<2x32x512xi32>
    %16 = vector.broadcast %14 : i32 to vector<2x32x512xi32>
    %17 = arith.addi %16, %15 : vector<2x32x512xi32>
    %c72_i32 = arith.constant 72 : i32
    %18 = vector.broadcast %c72_i32 : i32 to vector<2x32x512xi32>
    %19 = arith.cmpi slt, %17, %18 : vector<2x32x512xi32>
    %cst_8 = arith.constant 0.000000e+00 : f32
    %20 = vector.broadcast %cst_8 : f32 to vector<2x32x512xf32>
    %21 = arith.select %19, %13, %20 : vector<2x32x512xi1>, vector<2x32x512xf32>
    %c0_9 = arith.constant 0 : index
    %c0_10 = arith.constant 0 : index
    %22 = vector.load %arg5[%c0_9, %c0_10] : memref<2x512xf32, #tpu.memory_space<vmem>>, vector<2x512xf32>
    %cst_11 = arith.constant dense<0.000000e+00> : vector<2x512xf32>
    %23 = vector.multi_reduction <add>, %21, %cst_11 [1] : vector<2x32x512xf32> to vector<2x512xf32>
    %24 = arith.addf %22, %23 : vector<2x512xf32>
    %c0_12 = arith.constant 0 : index
    %c0_13 = arith.constant 0 : index
    %25 = vector.load %arg5[%c0_12, %c0_13] : memref<2x512xf32, #tpu.memory_space<vmem>>, vector<2x512xf32>
    tpu.vector_store %arg5[%c0_12, %c0_13], %24 {strides = array<i32>} : memref<2x512xf32, #tpu.memory_space<vmem>>, vector<2x512xf32>,
    %c2_i32 = arith.constant 2 : i32
    %26 = arith.cmpi eq, %arg1, %c2_i32 : i32
    %27 = arith.extui %26 : i1 to i32
    %c0_i32_14 = arith.constant 0 : i32
    %28 = arith.cmpi ne, %27, %c0_i32_14 : i32
    scf.if %28 {
      %c0_15 = arith.constant 0 : index
      %c0_16 = arith.constant 0 : index
      %29 = vector.load %arg5[%c0_15, %c0_16] : memref<2x512xf32, #tpu.memory_space<vmem>>, vector<2x512xf32>
      %cst_17 = arith.constant 0.013888889 : f32
      %30 = vector.broadcast %cst_17 : f32 to vector<2x512xf32>
      %31 = arith.mulf %29, %30 : vector<2x512xf32>
      %c0_18 = arith.constant 0 : index
      %c0_19 = arith.constant 0 : index
      %32 = vector.load %arg5[%c0_18, %c0_19] : memref<2x512xf32, #tpu.memory_space<vmem>>, vector<2x512xf32>
      tpu.vector_store %arg5[%c0_18, %c0_19], %31 {strides = array<i32>} : memref<2x512xf32, #tpu.memory_space<vmem>>, vector<2x512xf32>,
    } else {
    }
    return
  }
  func.func @transform_0(%arg0: i32, %arg1: i32) -> (i32, i32, i32) {
    %c0_i32 = arith.constant 0 : i32
    %c0_i32_0 = arith.constant 0 : i32
    return %arg0, %arg1, %c0_i32 : i32, i32, i32
  }
  func.func @transform_1(%arg0: i32, %arg1: i32) -> (i32, i32) {
    %c0_i32 = arith.constant 0 : i32
    %c0_i32_0 = arith.constant 0 : i32
    %c0_i32_1 = arith.constant 0 : i32
    return %c0_i32, %c0_i32_0 : i32, i32
  }
  func.func @transform_2(%arg0: i32, %arg1: i32) -> (i32, i32) {
    %c0_i32 = arith.constant 0 : i32
    %c0_i32_0 = arith.constant 0 : i32
    %c0_i32_1 = arith.constant 0 : i32
    return %c0_i32, %c0_i32_0 : i32, i32
  }
  func.func @transform_3(%arg0: i32, %arg1: i32) -> (i32, i32) {
    %c0_i32 = arith.constant 0 : i32
    %c0_i32_0 = arith.constant 0 : i32
    return %arg0, %c0_i32 : i32, i32
  }
}

</mosaic_0001>

<llo_original>
// kernel: mean_mil_forward.1
$region0: #{mean_mil_forward.1}
  #allocation0 [shape = 'u32[]', space=smem, size = 0x4, offset = 0x4, fixed_abs, tag = 'smem constant byte address 0x4 - core index']
  #allocation1 [shape = 'u32[144,128]{1,0:T(1,128)}', space=vmem, size = 0x12000, scoped, tag = 'internal scratch']
  %s0 = inlined_call_operand.vmem [shape: f32[2,72,512], index: 0, kind: input, shape index: {}]
  %s1 = inlined_call_operand.vmem [shape: bf16[512,512], index: 1, kind: input, shape index: {}]
  %s2 = inlined_call_operand.vmem [shape: f32[1,512], index: 2, kind: input, shape index: {}]
  %s3 = inlined_call_operand.vmem [shape: f32[2,512], index: 3, kind: output, shape index: {}]
  %s4 = sld [smem:[#allocation0]]
  $region83: #{mean_mil_forward.1} parent=0
    _
  %s6 = ssub.s32 1, %s4
  %s7 = scalar_select 0, %s6, %s4
  $region1: #{mean_mil_forward.1} parent=0
    #allocation2 [shape = 'u8[262144]{0}', space=vmem, size = 0x40000, scoped, tag = 'input window, operand 0']
    loop: start=0, step=1, limit=5
    $region2: #{mean_mil_forward.1} parent=1 // loop_pre_header
      _
    $region3: #{mean_mil_forward.1} parent=1 // loop_header
      %s9 = sphi 0, %s13
      %p10 = scmp.ge.s32.totalorder %s9, 5
      %s16 = sphi 0, %s28
      %s17 = sphi 0, %s24
      %s18 = sphi 0, %s16
      %s19 = sphi 0, %s17
      %s20 = sphi 0, %s18
      %s21 = sphi 0, %s19
      %s33 = sphi 0, %s35
      %s36 = sphi 0, %s33
      %s37 = sphi 0, %s36
      %s53 = sphi 0, %s37
      %s57 = sphi 0, %s57
      %s59 = sphi 0, %s57
      %s60 = sphi 0, %s59
      %s74 = sphi 0, %s60
      %s78 = sphi 0, %s78
      %s80 = sphi 0, %s78
      %s81 = sphi 0, %s80
      %s95 = sphi 0, %s81
      %s101 = sphi 0, %s103
      %s104 = sphi 0, %s101
      %s105 = sphi 0, %s104
      %s121 = sphi 0, %s105
    $region4: #{mean_mil_forward.1} parent=1 // loop_header_branch
      %12 = sbr.rel (%p10) target = $region8
    $region5: #{mean_mil_forward.1} parent=1 // loop_body
      %s14 = ssub.s32 %s9, 1
      %s15 = ssub.s32 %s9, 2
      %s22 = sadd.s32 1, %s17
      %p23 = scmp.ge.s32.totalorder %s22, 3
      %s24 = scalar_select %p23, 0, %s22
      %s25 = sadd.s32 1, %s16
      %s26 = scalar_select %p23, %s25, %s16
      %p27 = scmp.ge.s32.totalorder %s26, 1
      %s28 = scalar_select %p27, 0, %s26
      %s29 = ssub.s32 %s16, %s28
      %s30 = ssub.s32 %s17, %s24
      %s31 = sor.u32 %s29, %s30
      %p32 = scmp.eq.s32.totalorder %s31, 0
      %s34 = sadd.s32 %s33, 1
      %s35 = scalar_select %p32, %s33, %s34
      %p38 = pneg %p32
      %p39 = scmp.eq.s32.totalorder %s9, 2
      %p40 = por %p38, %p39
      %p41 = scmp.ne.s32.totalorder %s33, %s36
      %p42 = scmp.eq.s32.totalorder %s9, 0
      %p43 = por %p41, %p42
      %p44 = scmp.ne.s32.totalorder %s33, %s36
      %p45 = scmp.eq.s32.totalorder %s14, 2
      %p46 = por %p44, %p45
      %p47 = scmp.ne.s32.totalorder %s36, %s37
      %p48 = scmp.eq.s32.totalorder %s14, 0
      %p49 = por %p47, %p48
      %p50 = scmp.ne.s32.totalorder %s36, %s37
      %p51 = scmp.eq.s32.totalorder %s15, 2
      %p52 = por %p50, %p51
      %p54 = scmp.ne.s32.totalorder %s37, %s53
      %p55 = scmp.eq.s32.totalorder %s15, 0
      %p56 = por %p54, %p55
      %s58 = sadd.s32 %s57, 1
      %p61 = scmp.eq.s32.totalorder %s9, 2
      %p62 = scmp.ne.s32.totalorder %s57, %s59
      %p63 = scmp.eq.s32.totalorder %s9, 0
      %p64 = por %p62, %p63
      %p65 = scmp.ne.s32.totalorder %s57, %s59
      %p66 = scmp.eq.s32.totalorder %s14, 2
      %p67 = por %p65, %p66
      %p68 = scmp.ne.s32.totalorder %s59, %s60
      %p69 = scmp.eq.s32.totalorder %s14, 0
      %p70 = por %p68, %p69
      %p71 = scmp.ne.s32.totalorder %s59, %s60
      %p72 = scmp.eq.s32.totalorder %s15, 2
      %p73 = por %p71, %p72
      %p75 = scmp.ne.s32.totalorder %s60, %s74
      %p76 = scmp.eq.s32.totalorder %s15, 0
      %p77 = por %p75, %p76
      %s79 = sadd.s32 %s78, 1
      %p82 = scmp.eq.s32.totalorder %s9, 2
      %p83 = scmp.ne.s32.totalorder %s78, %s80
      %p84 = scmp.eq.s32.totalorder %s9, 0
      %p85 = por %p83, %p84
      %p86 = scmp.ne.s32.totalorder %s78, %s80
      %p87 = scmp.eq.s32.totalorder %s14, 2
      %p88 = por %p86, %p87
      %p89 = scmp.ne.s32.totalorder %s80, %s81
      %p90 = scmp.eq.s32.totalorder %s14, 0
      %p91 = por %p89, %p90
      %p92 = scmp.ne.s32.totalorder %s80, %s81
      %p93 = scmp.eq.s32.totalorder %s15, 2
      %p94 = por %p92, %p93
      %p96 = scmp.ne.s32.totalorder %s81, %s95
      %p97 = scmp.eq.s32.totalorder %s15, 0
      %p98 = por %p96, %p97
      %s99 = ssub.s32 %s16, %s28
      %p100 = scmp.eq.s32.totalorder %s99, 0
      %s102 = sadd.s32 %s101, 1
      %s103 = scalar_select %p100, %s101, %s102
      %p106 = pneg %p100
      %p107 = scmp.eq.s32.totalorder %s9, 2
      %p108 = por %p106, %p107
      %p109 = scmp.ne.s32.totalorder %s101, %s104
      %p110 = scmp.eq.s32.totalorder %s9, 0
      %p111 = por %p109, %p110
      %p112 = scmp.ne.s32.totalorder %s101, %s104
      %p113 = scmp.eq.s32.totalorder %s14, 2
      %p114 = por %p112, %p113
      %p115 = scmp.ne.s32.totalorder %s104, %s105
      %p116 = scmp.eq.s32.totalorder %s14, 0
      %p117 = por %p115, %p116
      %p118 = scmp.ne.s32.totalorder %s104, %s105
      %p119 = scmp.eq.s32.totalorder %s15, 2
      %p120 = por %p118, %p119
      %p122 = scmp.ne.s32.totalorder %s105, %s121
      %p123 = scmp.eq.s32.totalorder %s15, 0
      %p124 = por %p122, %p123
      %p125 = scmp.le.s32.totalorder 1, %s9
      %p126 = scmp.lt.s32.totalorder %s9, 4
      %p127 = pnand %p125, %p126
      %p128 = pneg %p127
      // Predicated region
      $region9: #{mean_mil_forward.1} parent=5 // pred_check
        _
      $region10: #{mean_mil_forward.1} parent=5 // pred_check_branch
        %130 = sbr.rel (%p127) target = $region12
      $region11: #{mean_mil_forward.1} parent=5 // pred_region
        %s131 = ssub.s32 %s9, 1
        // Predicated region
        $region13: #{mean_mil_forward.1} parent=11 // pred_check
          %p132 = pneg %p70
        $region14: #{mean_mil_forward.1} parent=11 // pred_check_branch
          %134 = sbr.rel (%p132) target = $region16
        $region15: #{mean_mil_forward.1} parent=11 // pred_region
          _
        $region16: #{mean_mil_forward.1} parent=11 // pred_fallthru
          _
        // Predicated region
        $region17: #{mean_mil_forward.1} parent=11 // pred_check
          %p135 = pneg %p91
        $region18: #{mean_mil_forward.1} parent=11 // pred_check_branch
          %137 = sbr.rel (%p135) target = $region20
        $region19: #{mean_mil_forward.1} parent=11 // pred_region
          _
        $region20: #{mean_mil_forward.1} parent=11 // pred_fallthru
          _
      $region12: #{mean_mil_forward.1} parent=5 // pred_fallthru
        _
      %p138 = scmp.lt.s32.totalorder %s9, 3
      // Predicated region
      $region21: #{mean_mil_forward.1} parent=5 // pred_check
        %p139 = pneg %p138
      $region22: #{mean_mil_forward.1} parent=5 // pred_check_branch
        %141 = sbr.rel (%p139) target = $region24
      $region23: #{mean_mil_forward.1} parent=5 // pred_region
        // Predicated region
        $region25: #{mean_mil_forward.1} parent=23 // pred_check
          %p142 = pneg %p43
        $region26: #{mean_mil_forward.1} parent=23 // pred_check_branch
          %144 = sbr.rel (%p142) target = $region28
        $region27: #{mean_mil_forward.1} parent=23 // pred_region
          %s145 = sand.u32 %s33, 1
          %s146 = sand.u32 %s33, 1
          %s147 = smul.addr %s146, 256
          %s148 = scalar_lea.vmem [#allocation2], %s147
          %s149 = smul.u32 2, %s16
          %s150 = smul.u32 4, %s17
          %s151 = ssub.s32 9, %s150
          %p152 = scmp.lt.s32.totalorder %s151, 4
          %s153 = scalar_select %p152, %s151, 4
          %s154 = smul.u32 256, %s153
          %s155 = smul.u32 %s154, 4
          %p156 = scmp.ne.s32.totalorder 0, %s155
          %s157 = smul.addr %s150, 4
          %s158 = smul.addr %s149, 36
          %s159 = sadd.s32 %s157, %s158
          %s160 = smul.addr %s159, 8
          %s161 = scalar_lea.vmem %s0, %s160
          // Predicated region
          $region29: #{mean_mil_forward.1} parent=27 // pred_check
            %p162 = pneg %p156
          $region30: #{mean_mil_forward.1} parent=27 // pred_check_branch
            %164 = sbr.rel (%p162) target = $region32
          $region31: #{mean_mil_forward.1} parent=27 // pred_region
            // Predicated region
            $region33: #{mean_mil_forward.1} parent=31 // pred_check
              _
            $region34: #{mean_mil_forward.1} parent=31 // pred_check_branch
              %166 = sbr.rel (0) target = $region36
            $region35: #{mean_mil_forward.1} parent=31 // pred_region
              %s167 = sshrl.u32 %s153, 2
              // While loop
              $region37: #{mean_mil_forward.1} parent=35 // loop_pre_header
                _
              $region38: #{mean_mil_forward.1} parent=35 // loop_header
                %s169 = sphi 0, %s171
                %p170 = scmp.ge.s32.totalorder %s169, %s167
                %s174 = sphi 0, %s243
                %s175 = sphi %s161, %s246
                %s176 = sphi %s148, %s247
              $region39: #{mean_mil_forward.1} parent=35 // loop_header_branch
                %173 = sbr.rel (%p170) target = $region43
              $region40: #{mean_mil_forward.1} parent=35 // loop_body
                %v177 = vld [vmem:[%s175] sm:$0xff]
                %178 = vst [vmem:[%s176] sm:$0xff] %v177
                %v179 = vld [vmem:[%s175 + $0x20] sm:$0xff]
                %180 = vst [vmem:[%s176 + $0x20] sm:$0xff] %v179
                %v181 = vld [vmem:[%s175 + $0x40] sm:$0xff]
                %182 = vst [vmem:[%s176 + $0x40] sm:$0xff] %v181
                %v183 = vld [vmem:[%s175 + $0x60] sm:$0xff]
                %184 = vst [vmem:[%s176 + $0x60] sm:$0xff] %v183
                %v185 = vld [vmem:[%s175 + $0x8] sm:$0xff]
                %186 = vst [vmem:[%s176 + $0x8] sm:$0xff] %v185
                %v187 = vld [vmem:[%s175 + $0x28] sm:$0xff]
                %188 = vst [vmem:[%s176 + $0x28] sm:$0xff] %v187
                %v189 = vld [vmem:[%s175 + $0x48] sm:$0xff]
                %190 = vst [vmem:[%s176 + $0x48] sm:$0xff] %v189
                %v191 = vld [vmem:[%s175 + $0x68] sm:$0xff]
                %192 = vst [vmem:[%s176 + $0x68] sm:$0xff] %v191
                %v193 = vld [vmem:[%s175 + $0x10] sm:$0xff]
                %194 = vst [vmem:[%s176 + $0x10] sm:$0xff] %v193
                %v195 = vld [vmem:[%s175 + $0x30] sm:$0xff]
                %196 = vst [vmem:[%s176 + $0x30] sm:$0xff] %v195
                %v197 = vld [vmem:[%s175 + $0x50] sm:$0xff]
                %198 = vst [vmem:[%s176 + $0x50] sm:$0xff] %v197
                %v199 = vld [vmem:[%s175 + $0x70] sm:$0xff]
                %200 = vst [vmem:[%s176 + $0x70] sm:$0xff] %v199
                %v201 = vld [vmem:[%s175 + $0x18] sm:$0xff]
                %202 = vst [vmem:[%s176 + $0x18] sm:$0xff] %v201
                %v203 = vld [vmem:[%s175 + $0x38] sm:$0xff]
                %204 = vst [vmem:[%s176 + $0x38] sm:$0xff] %v203
                %v205 = vld [vmem:[%s175 + $0x58] sm:$0xff]
                %206 = vst [vmem:[%s176 + $0x58] sm:$0xff] %v205
                %v207 = vld [vmem:[%s175 + $0x78] sm:$0xff]
                %208 = vst [vmem:[%s176 + $0x78] sm:$0xff] %v207
                %v209 = vld [vmem:[%s175 + $0x120] sm:$0xff]
                %210 = vst [vmem:[%s176 + $0x80] sm:$0xff] %v209
                %v211 = vld [vmem:[%s175 + $0x140] sm:$0xff]
                %212 = vst [vmem:[%s176 + $0xa0] sm:$0xff] %v211
                %v213 = vld [vmem:[%s175 + $0x160] sm:$0xff]
                %214 = vst [vmem:[%s176 + $0xc0] sm:$0xff] %v213
                %v215 = vld [vmem:[%s175 + $0x180] sm:$0xff]
                %216 = vst [vmem:[%s176 + $0xe0] sm:$0xff] %v215
                %v217 = vld [vmem:[%s175 + $0x128] sm:$0xff]
                %218 = vst [vmem:[%s176 + $0x88] sm:$0xff] %v217
                %v219 = vld [vmem:[%s175 + $0x148] sm:$0xff]
                %220 = vst [vmem:[%s176 + $0xa8] sm:$0xff] %v219
                %v221 = vld [vmem:[%s175 + $0x168] sm:$0xff]
                %222 = vst [vmem:[%s176 + $0xc8] sm:$0xff] %v221
                %v223 = vld [vmem:[%s175 + $0x188] sm:$0xff]
                %224 = vst [vmem:[%s176 + $0xe8] sm:$0xff] %v223
                %v225 = vld [vmem:[%s175 + $0x130] sm:$0xff]
                %226 = vst [vmem:[%s176 + $0x90] sm:$0xff] %v225
                %v227 = vld [vmem:[%s175 + $0x150] sm:$0xff]
                %228 = vst [vmem:[%s176 + $0xb0] sm:$0xff] %v227
                %v229 = vld [vmem:[%s175 + $0x170] sm:$0xff]
                %230 = vst [vmem:[%s176 + $0xd0] sm:$0xff] %v229
                %v231 = vld [vmem:[%s175 + $0x190] sm:$0xff]
                %232 = vst [vmem:[%s176 + $0xf0] sm:$0xff] %v231
                %v233 = vld [vmem:[%s175 + $0x138] sm:$0xff]
                %234 = vst [vmem:[%s176 + $0x98] sm:$0xff] %v233
                %v235 = vld [vmem:[%s175 + $0x158] sm:$0xff]
                %236 = vst [vmem:[%s176 + $0xb8] sm:$0xff] %v235
                %v237 = vld [vmem:[%s175 + $0x178] sm:$0xff]
                %238 = vst [vmem:[%s176 + $0xd8] sm:$0xff] %v237
                %v239 = vld [vmem:[%s175 + $0x198] sm:$0xff]
                %240 = vst [vmem:[%s176 + $0xf8] sm:$0xff] %v239
                %s241 = sadd.s32 1, %s174
                %p242 = scmp.ge.s32.totalorder %s241, %s167
                %s243 = scalar_select %p242, 0, %s241
                %s244 = smul.u32 %s243, 128
                %s245 = smul.u32 %s243, 128
                %s246 = scalar_lea.vmem %s161, %s244
                %s247 = scalar_lea.vmem %s148, %s245 [#allocation2]
              $region41: #{mean_mil_forward.1} parent=35 // loop_footer
                %s171 = sadd.s32 %s169, 1
              $region42: #{mean_mil_forward.1} parent=35 // loop_footer_branch
                %168 = sbr.rel target = $region38
              $region43: #{mean_mil_forward.1} parent=35 // loop_exit
                _
              %s248 = sshrl.u32 %s153, 2
              %s249 = sand.u32 %s153, 3
              %s250 = smul.u32 %s248, 4
              %s251 = smul.u32 32, %s250
              %s252 = scalar_lea.vmem %s161, %s251
              %s253 = smul.u32 32, %s250
              %s254 = scalar_lea.vmem %s148, %s253 [#allocation2]
              // While loop
              $region44: #{mean_mil_forward.1} parent=35 // loop_pre_header
                _
              $region45: #{mean_mil_forward.1} parent=35 // loop_header
                %s256 = sphi 0, %s258
                %p257 = scmp.ge.s32.totalorder %s256, %s249
                %s261 = sphi 0, %s282
                %s262 = sphi %s252, %s285
                %s263 = sphi %s254, %s286
              $region46: #{mean_mil_forward.1} parent=35 // loop_header_branch
                %260 = sbr.rel (%p257) target = $region50
              $region47: #{mean_mil_forward.1} parent=35 // loop_body
                %v264 = vld [vmem:[%s262] sm:$0xff]
                %265 = vst [vmem:[%s263] sm:$0xff] %v264
                %v266 = vld [vmem:[%s262 + $0x8] sm:$0xff]
                %267 = vst [vmem:[%s263 + $0x8] sm:$0xff] %v266
                %v268 = vld [vmem:[%s262 + $0x10] sm:$0xff]
                %269 = vst [vmem:[%s263 + $0x10] sm:$0xff] %v268
                %v270 = vld [vmem:[%s262 + $0x18] sm:$0xff]
                %271 = vst [vmem:[%s263 + $0x18] sm:$0xff] %v270
                %v272 = vld [vmem:[%s262 + $0x120] sm:$0xff]
                %273 = vst [vmem:[%s263 + $0x80] sm:$0xff] %v272
                %v274 = vld [vmem:[%s262 + $0x128] sm:$0xff]
                %275 = vst [vmem:[%s263 + $0x88] sm:$0xff] %v274
                %v276 = vld [vmem:[%s262 + $0x130] sm:$0xff]
                %277 = vst [vmem:[%s263 + $0x90] sm:$0xff] %v276
                %v278 = vld [vmem:[%s262 + $0x138] sm:$0xff]
                %279 = vst [vmem:[%s263 + $0x98] sm:$0xff] %v278
                %s280 = sadd.s32 1, %s261
                %p281 = scmp.ge.s32.totalorder %s280, %s249
                %s282 = scalar_select %p281, 0, %s280
                %s283 = smul.u32 %s282, 32
                %s284 = smul.u32 %s282, 32
                %s285 = scalar_lea.vmem %s252, %s283
                %s286 = scalar_lea.vmem %s254, %s284 [#allocation2]
              $region48: #{mean_mil_forward.1} parent=35 // loop_footer
                %s258 = sadd.s32 %s256, 1
              $region49: #{mean_mil_forward.1} parent=35 // loop_footer_branch
                %255 = sbr.rel target = $region45
              $region50: #{mean_mil_forward.1} parent=35 // loop_exit
                _
            $region36: #{mean_mil_forward.1} parent=31 // pred_fallthru
              _
            // Predicated region
            $region51: #{mean_mil_forward.1} parent=31 // pred_check
              _
            $region52: #{mean_mil_forward.1} parent=31 // pred_check_branch
              %288 = sbr.rel target = $region54
            $region53: #{mean_mil_forward.1} parent=31 // pred_region
              _
            $region54: #{mean_mil_forward.1} parent=31 // pred_fallthru
              _
          $region32: #{mean_mil_forward.1} parent=27 // pred_fallthru
            _
          %289 = vnop
        $region28: #{mean_mil_forward.1} parent=23 // pred_fallthru
          _
      $region24: #{mean_mil_forward.1} parent=5 // pred_fallthru
        _
      %p290 = scmp.le.s32.totalorder 1, %s9
      %p291 = scmp.lt.s32.totalorder %s9, 4
      %p292 = pnand %p290, %p291
      %p293 = pneg %p292
      // Predicated region
      $region55: #{mean_mil_forward.1} parent=5 // pred_check
        _
      $region56: #{mean_mil_forward.1} parent=5 // pred_check_branch
        %295 = sbr.rel (%p292) target = $region58
      $region57: #{mean_mil_forward.1} parent=5 // pred_region
        %s296 = ssub.s32 %s9, 1
        %s297 = sand.u32 %s36, 1
        %s298 = sand.u32 %s36, 1
        %s299 = smul.addr %s298, 256
        %s300 = scalar_lea.vmem [#allocation2], %s299
        // Predicated region
        $region59: #{mean_mil_forward.1} parent=57 // pred_check
          %p301 = pneg %p49
        $region60: #{mean_mil_forward.1} parent=57 // pred_check_branch
          %303 = sbr.rel (%p301) target = $region62
        $region61: #{mean_mil_forward.1} parent=57 // pred_region
          _
        $region62: #{mean_mil_forward.1} parent=57 // pred_fallthru
          _
        %s304 = sand.u32 %s36, 1
        %s305 = sand.u32 %s36, 1
        %s306 = smul.addr %s305, 256
        %s307 = scalar_lea.vmem [#allocation2], %s306
        %p308 = pneg %p49
        %p309 = pneg %p46
        %p310 = pneg %p70
        %p311 = pneg %p67
        %p312 = pneg %p91
        %p313 = pneg %p88
        %p314 = pneg %p117
        %p315 = pneg %p114
        %p316 = scmp.lt.s32.totalorder %s18, 0
        %s317 = scalar_select %p316, %s18, 0
        %s318 = smul.addr %s317, 4
        %s319 = smul.addr %s318, 2
        %s320 = scalar_lea.vmem %s3, %s319
        %s321 = smul.u32 2, %s18
        %s322 = smul.u32 4, %s19
        %s323 = ssub.s32 9, %s322
        %p324 = scmp.lt.s32.totalorder %s323, 4
        %s325 = scalar_select %p324, %s323, 4
        %s326 = smul.u32 256, %s325
        %s327 = smul.u32 %s326, 4
        %p328 = scmp.lt.s32.totalorder %s18, 0
        %s329 = scalar_select %p328, %s18, 0
        %s330 = smul.addr %s329, 4
        %s331 = smul.addr %s330, 2
        %s332 = scalar_lea.vmem %s3, %s331
        %p333 = scmp.eq.s32.totalorder %s19, 0
        // Predicated region
        $region63: #{mean_mil_forward.1} parent=57 // pred_check
          %p334 = pneg %p333
        $region64: #{mean_mil_forward.1} parent=57 // pred_check_branch
          %336 = sbr.rel (%p334) target = $region66
        $region65: #{mean_mil_forward.1} parent=57 // pred_region
          %337 = vst [vmem:[%s332] sm:$0xff] 0.0
        $region66: #{mean_mil_forward.1} parent=57 // pred_fallthru
          _
        %v338 = vld [vmem:[%s300] sm:$0xff]
        %v339 = vld [vmem:[%s300 + $0x8] sm:$0xff]
        %v340 = vld [vmem:[%s300 + $0x10] sm:$0xff]
        %v341 = vld [vmem:[%s300 + $0x18] sm:$0xff]
        %v342 = vld [vmem:[%s300 + $0x20] sm:$0xff]
        %v343 = vld [vmem:[%s300 + $0x28] sm:$0xff]
        %v344 = vld [vmem:[%s300 + $0x30] sm:$0xff]
        %v345 = vld [vmem:[%s300 + $0x38] sm:$0xff]
        %v346 = vld [vmem:[%s300 + $0x40] sm:$0xff]
        %v347 = vld [vmem:[%s300 + $0x48] sm:$0xff]
        %v348 = vld [vmem:[%s300 + $0x50] sm:$0xff]
        %v349 = vld [vmem:[%s300 + $0x58] sm:$0xff]
        %v350 = vld [vmem:[%s300 + $0x60] sm:$0xff]
        %v351 = vld [vmem:[%s300 + $0x68] sm:$0xff]
        %v352 = vld [vmem:[%s300 + $0x70] sm:$0xff]
        %v353 = vld [vmem:[%s300 + $0x78] sm:$0xff]
        %v354 = vld [vmem:[%s300 + $0x80] sm:$0xff]
        %v355 = vld [vmem:[%s300 + $0x88] sm:$0xff]
        %v356 = vld [vmem:[%s300 + $0x90] sm:$0xff]
        %v357 = vld [vmem:[%s300 + $0x98] sm:$0xff]
        %v358 = vld [vmem:[%s300 + $0xa0] sm:$0xff]
        %v359 = vld [vmem:[%s300 + $0xa8] sm:$0xff]
        %v360 = vld [vmem:[%s300 + $0xb0] sm:$0xff]
        %v361 = vld [vmem:[%s300 + $0xb8] sm:$0xff]
        %v362 = vld [vmem:[%s300 + $0xc0] sm:$0xff]
        %v363 = vld [vmem:[%s300 + $0xc8] sm:$0xff]
        %v364 = vld [vmem:[%s300 + $0xd0] sm:$0xff]
        %v365 = vld [vmem:[%s300 + $0xd8] sm:$0xff]
        %v366 = vld [vmem:[%s300 + $0xe0] sm:$0xff]
        %v367 = vld [vmem:[%s300 + $0xe8] sm:$0xff]
        %v368 = vld [vmem:[%s300 + $0xf0] sm:$0xff]
        %v369 = vld [vmem:[%s300 + $0xf8] sm:$0xff]
        %v370 = vpack.c.bf16 %v342, %v338
        %v371 = vpack.c.bf16 %v343, %v339
        %v372 = vpack.c.bf16 %v344, %v340
        %v373 = vpack.c.bf16 %v345, %v341
        %v374 = vpack.c.bf16 %v350, %v346
        %v375 = vpack.c.bf16 %v351, %v347
        %v376 = vpack.c.bf16 %v352, %v348
        %v377 = vpack.c.bf16 %v353, %v349
        %v378 = vpack.c.bf16 %v358, %v354
        %v379 = vpack.c.bf16 %v359, %v355
        %v380 = vpack.c.bf16 %v360, %v356
        %v381 = vpack.c.bf16 %v361, %v357
        %v382 = vpack.c.bf16 %v366, %v362
        %v383 = vpack.c.bf16 %v367, %v363
        %v384 = vpack.c.bf16 %v368, %v364
        %v385 = vpack.c.bf16 %v369, %v365
        %v386 = vld [vmem:[%s1] sm:$0xff]
        %v387 = vld [vmem:[%s1 + $0x8] sm:$0xff]
        %v388 = vld [vmem:[%s1 + $0x10] sm:$0xff]
        %v389 = vld [vmem:[%s1 + $0x18] sm:$0xff]
        %v390 = vld [vmem:[%s1 + $0x20] sm:$0xff]
        %v391 = vld [vmem:[%s1 + $0x28] sm:$0xff]
        %v392 = vld [vmem:[%s1 + $0x30] sm:$0xff]
        %v393 = vld [vmem:[%s1 + $0x38] sm:$0xff]
        %v394 = vld [vmem:[%s1 + $0x40] sm:$0xff]
        %v395 = vld [vmem:[%s1 + $0x48] sm:$0xff]
        %v396 = vld [vmem:[%s1 + $0x50] sm:$0xff]
        %v397 = vld [vmem:[%s1 + $0x58] sm:$0xff]
        %v398 = vld [vmem:[%s1 + $0x60] sm:$0xff]
        %v399 = vld [vmem:[%s1 + $0x68] sm:$0xff]
        %v400 = vld [vmem:[%s1 + $0x70] sm:$0xff]
        %v401 = vld [vmem:[%s1 + $0x78] sm:$0xff]
        %v402 = vld [vmem:[%s1 + $0x80] sm:$0xff]
        %v403 = vld [vmem:[%s1 + $0x88] sm:$0xff]
        %v404 = vld [vmem:[%s1 + $0x90] sm:$0xff]
        %v405 = vld [vmem:[%s1 + $0x98] sm:$0xff]
        %v406 = vld [vmem:[%s1 + $0xa0] sm:$0xff]
        %v407 = vld [vmem:[%s1 + $0xa8] sm:$0xff]
        %v408 = vld [vmem:[%s1 + $0xb0] sm:$0xff]
        %v409 = vld [vmem:[%s1 + $0xb8] sm:$0xff]
        %v410 = vld [vmem:[%s1 + $0xc0] sm:$0xff]
        %v411 = vld [vmem:[%s1 + $0xc8] sm:$0xff]
        %v412 = vld [vmem:[%s1 + $0xd0] sm:$0xff]
        %v413 = vld [vmem:[%s1 + $0xd8] sm:$0xff]
        %v414 = vld [vmem:[%s1 + $0xe0] sm:$0xff]
        %v415 = vld [vmem:[%s1 + $0xe8] sm:$0xff]
        %v416 = vld [vmem:[%s1 + $0xf0] sm:$0xff]
        %v417 = vld [vmem:[%s1 + $0xf8] sm:$0xff]
        %v418 = vld [vmem:[%s1 + $0x100] sm:$0xff]
        %v419 = vld [vmem:[%s1 + $0x108] sm:$0xff]
        %v420 = vld [vmem:[%s1 + $0x110] sm:$0xff]
        %v421 = vld [vmem:[%s1 + $0x118] sm:$0xff]
        %v422 = vld [vmem:[%s1 + $0x120] sm:$0xff]
        %v423 = vld [vmem:[%s1 + $0x128] sm:$0xff]
        %v424 = vld [vmem:[%s1 + $0x130] sm:$0xff]
        %v425 = vld [vmem:[%s1 + $0x138] sm:$0xff]
        %v426 = vld [vmem:[%s1 + $0x140] sm:$0xff]
        %v427 = vld [vmem:[%s1 + $0x148] sm:$0xff]
        %v428 = vld [vmem:[%s1 + $0x150] sm:$0xff]
        %v429 = vld [vmem:[%s1 + $0x158] sm:$0xff]
        %v430 = vld [vmem:[%s1 + $0x160] sm:$0xff]
        %v431 = vld [vmem:[%s1 + $0x168] sm:$0xff]
        %v432 = vld [vmem:[%s1 + $0x170] sm:$0xff]
        %v433 = vld [vmem:[%s1 + $0x178] sm:$0xff]
        %v434 = vld [vmem:[%s1 + $0x180] sm:$0xff]
        %v435 = vld [vmem:[%s1 + $0x188] sm:$0xff]
        %v436 = vld [vmem:[%s1 + $0x190] sm:$0xff]
        %v437 = vld [vmem:[%s1 + $0x198] sm:$0xff]
        %v438 = vld [vmem:[%s1 + $0x1a0] sm:$0xff]
        %v439 = vld [vmem:[%s1 + $0x1a8] sm:$0xff]
        %v440 = vld [vmem:[%s1 + $0x1b0] sm:$0xff]
        %v441 = vld [vmem:[%s1 + $0x1b8] sm:$0xff]
        %v442 = vld [vmem:[%s1 + $0x1c0] sm:$0xff]
        %v443 = vld [vmem:[%s1 + $0x1c8] sm:$0xff]
        %v444 = vld [vmem:[%s1 + $0x1d0] sm:$0xff]
        %v445 = vld [vmem:[%s1 + $0x1d8] sm:$0xff]
        %v446 = vld [vmem:[%s1 + $0x1e0] sm:$0xff]
        %v447 = vld [vmem:[%s1 + $0x1e8] sm:$0xff]
        %v448 = vld [vmem:[%s1 + $0x1f0] sm:$0xff]
        %v449 = vld [vmem:[%s1 + $0x1f8] sm:$0xff]
        %v450 = vld [vmem:[%s1 + $0x200] sm:$0xff]
        %v451 = vld [vmem:[%s1 + $0x208] sm:$0xff]
        %v452 = vld [vmem:[%s1 + $0x210] sm:$0xff]
        %v453 = vld [vmem:[%s1 + $0x218] sm:$0xff]
        %v454 = vld [vmem:[%s1 + $0x220] sm:$0xff]
        %v455 = vld [vmem:[%s1 + $0x228] sm:$0xff]
        %v456 = vld [vmem:[%s1 + $0x230] sm:$0xff]
        %v457 = vld [vmem:[%s1 + $0x238] sm:$0xff]
        %v458 = vld [vmem:[%s1 + $0x240] sm:$0xff]
        %v459 = vld [vmem:[%s1 + $0x248] sm:$0xff]
        %v460 = vld [vmem:[%s1 + $0x250] sm:$0xff]
        %v461 = vld [vmem:[%s1 + $0x258] sm:$0xff]
        %v462 = vld [vmem:[%s1 + $0x260] sm:$0xff]
        %v463 = vld [vmem:[%s1 + $0x268] sm:$0xff]
        %v464 = vld [vmem:[%s1 + $0x270] sm:$0xff]
        %v465 = vld [vmem:[%s1 + $0x278] sm:$0xff]
        %v466 = vld [vmem:[%s1 + $0x280] sm:$0xff]
        %v467 = vld [vmem:[%s1 + $0x288] sm:$0xff]
        %v468 = vld [vmem:[%s1 + $0x290] sm:$0xff]
        %v469 = vld [vmem:[%s1 + $0x298] sm:$0xff]
        %v470 = vld [vmem:[%s1 + $0x2a0] sm:$0xff]
        %v471 = vld [vmem:[%s1 + $0x2a8] sm:$0xff]
        %v472 = vld [vmem:[%s1 + $0x2b0] sm:$0xff]
        %v473 = vld [vmem:[%s1 + $0x2b8] sm:$0xff]
        %v474 = vld [vmem:[%s1 + $0x2c0] sm:$0xff]
        %v475 = vld [vmem:[%s1 + $0x2c8] sm:$0xff]
        %v476 = vld [vmem:[%s1 + $0x2d0] sm:$0xff]
        %v477 = vld [vmem:[%s1 + $0x2d8] sm:$0xff]
        %v478 = vld [vmem:[%s1 + $0x2e0] sm:$0xff]
        %v479 = vld [vmem:[%s1 + $0x2e8] sm:$0xff]
        %v480 = vld [vmem:[%s1 + $0x2f0] sm:$0xff]
        %v481 = vld [vmem:[%s1 + $0x2f8] sm:$0xff]
        %v482 = vld [vmem:[%s1 + $0x300] sm:$0xff]
        %v483 = vld [vmem:[%s1 + $0x308] sm:$0xff]
        %v484 = vld [vmem:[%s1 + $0x310] sm:$0xff]
        %v485 = vld [vmem:[%s1 + $0x318] sm:$0xff]
        %v486 = vld [vmem:[%s1 + $0x320] sm:$0xff]
        %v487 = vld [vmem:[%s1 + $0x328] sm:$0xff]
        %v488 = vld [vmem:[%s1 + $0x330] sm:$0xff]
        %v489 = vld [vmem:[%s1 + $0x338] sm:$0xff]
        %v490 = vld [vmem:[%s1 + $0x340] sm:$0xff]
        %v491 = vld [vmem:[%s1 + $0x348] sm:$0xff]
        %v492 = vld [vmem:[%s1 + $0x350] sm:$0xff]
        %v493 = vld [vmem:[%s1 + $0x358] sm:$0xff]
        %v494 = vld [vmem:[%s1 + $0x360] sm:$0xff]
        %v495 = vld [vmem:[%s1 + $0x368] sm:$0xff]
        %v496 = vld [vmem:[%s1 + $0x370] sm:$0xff]
        %v497 = vld [vmem:[%s1 + $0x378] sm:$0xff]
        %v498 = vld [vmem:[%s1 + $0x380] sm:$0xff]
        %v499 = vld [vmem:[%s1 + $0x388] sm:$0xff]
        %v500 = vld [vmem:[%s1 + $0x390] sm:$0xff]
        %v501 = vld [vmem:[%s1 + $0x398] sm:$0xff]
        %v502 = vld [vmem:[%s1 + $0x3a0] sm:$0xff]
        %v503 = vld [vmem:[%s1 + $0x3a8] sm:$0xff]
        %v504 = vld [vmem:[%s1 + $0x3b0] sm:$0xff]
        %v505 = vld [vmem:[%s1 + $0x3b8] sm:$0xff]
        %v506 = vld [vmem:[%s1 + $0x3c0] sm:$0xff]
        %v507 = vld [vmem:[%s1 + $0x3c8] sm:$0xff]
        %v508 = vld [vmem:[%s1 + $0x3d0] sm:$0xff]
        %v509 = vld [vmem:[%s1 + $0x3d8] sm:$0xff]
        %v510 = vld [vmem:[%s1 + $0x3e0] sm:$0xff]
        %v511 = vld [vmem:[%s1 + $0x3e8] sm:$0xff]
        %v512 = vld [vmem:[%s1 + $0x3f0] sm:$0xff]
        %v513 = vld [vmem:[%s1 + $0x3f8] sm:$0xff]
        %v514 = vld [vmem:[%s2] sm:$0xf]
        %v516 = vlaneseq
        %v517 = vshrl.u32 %v516, 7
        %v518 = vsub.s32 0, %v517
        %v519 = vrot.slane %v514, %v518
        %v520 = vlaneseq
        %v521 = vshrl.u32 %v520, 7
        %v522 = vsub.s32 1, %v521
        %v523 = vrot.slane %v514, %v522
        %v524 = vlaneseq
        %v525 = vshrl.u32 %v524, 7
        %v526 = vsub.s32 2, %v525
        %v527 = vrot.slane %v514, %v526
        %v528 = vlaneseq
        %v529 = vshrl.u32 %v528, 7
        %v530 = vsub.s32 3, %v529
        %v531 = vrot.slane %v514, %v530
        %v664 = vunpack.c.l.b16 %v386
        %v665 = vunpack.c.h.b16 %v386
        %v666 = vunpack.c.l.b16 %v387
        %v667 = vunpack.c.h.b16 %v387
        %v668 = vunpack.c.l.b16 %v388
        %v669 = vunpack.c.h.b16 %v388
        %v670 = vunpack.c.l.b16 %v389
        %v671 = vunpack.c.h.b16 %v389
        %v672 = vunpack.c.l.b16 %v390
        %v673 = vunpack.c.h.b16 %v390
        %v674 = vunpack.c.l.b16 %v391
        %v675 = vunpack.c.h.b16 %v391
        %v676 = vunpack.c.l.b16 %v392
        %v677 = vunpack.c.h.b16 %v392
        %v678 = vunpack.c.l.b16 %v393
        %v679 = vunpack.c.h.b16 %v393
        %v680 = vunpack.c.l.b16 %v394
        %v681 = vunpack.c.h.b16 %v394
        %v682 = vunpack.c.l.b16 %v395
        %v683 = vunpack.c.h.b16 %v395
        %v684 = vunpack.c.l.b16 %v396
        %v685 = vunpack.c.h.b16 %v396
        %v686 = vunpack.c.l.b16 %v397
        %v687 = vunpack.c.h.b16 %v397
        %v688 = vunpack.c.l.b16 %v398
        %v689 = vunpack.c.h.b16 %v398
        %v690 = vunpack.c.l.b16 %v399
        %v691 = vunpack.c.h.b16 %v399
        %v692 = vunpack.c.l.b16 %v400
        %v693 = vunpack.c.h.b16 %v400
        %v694 = vunpack.c.l.b16 %v401
        %v695 = vunpack.c.h.b16 %v401
        %v696 = vunpack.c.l.b16 %v402
        %v697 = vunpack.c.h.b16 %v402
        %v698 = vunpack.c.l.b16 %v403
        %v699 = vunpack.c.h.b16 %v403
        %v700 = vunpack.c.l.b16 %v404
        %v701 = vunpack.c.h.b16 %v404
        %v702 = vunpack.c.l.b16 %v405
        %v703 = vunpack.c.h.b16 %v405
        %v704 = vunpack.c.l.b16 %v406
        %v705 = vunpack.c.h.b16 %v406
        %v706 = vunpack.c.l.b16 %v407
        %v707 = vunpack.c.h.b16 %v407
        %v708 = vunpack.c.l.b16 %v408
        %v709 = vunpack.c.h.b16 %v408
        %v710 = vunpack.c.l.b16 %v409
        %v711 = vunpack.c.h.b16 %v409
        %v712 = vunpack.c.l.b16 %v410
        %v713 = vunpack.c.h.b16 %v410
        %v714 = vunpack.c.l.b16 %v411
        %v715 = vunpack.c.h.b16 %v411
        %v716 = vunpack.c.l.b16 %v412
        %v717 = vunpack.c.h.b16 %v412
        %v718 = vunpack.c.l.b16 %v413
        %v719 = vunpack.c.h.b16 %v413
        %v720 = vunpack.c.l.b16 %v414
        %v721 = vunpack.c.h.b16 %v414
        %v722 = vunpack.c.l.b16 %v415
        %v723 = vunpack.c.h.b16 %v415
        %v724 = vunpack.c.l.b16 %v416
        %v725 = vunpack.c.h.b16 %v416
        %v726 = vunpack.c.l.b16 %v417
        %v727 = vunpack.c.h.b16 %v417
        %v728 = vunpack.c.l.b16 %v418
        %v729 = vunpack.c.h.b16 %v418
        %v730 = vunpack.c.l.b16 %v419
        %v731 = vunpack.c.h.b16 %v419
        %v732 = vunpack.c.l.b16 %v420
        %v733 = vunpack.c.h.b16 %v420
        %v734 = vunpack.c.l.b16 %v421
        %v735 = vunpack.c.h.b16 %v421
        %v736 = vunpack.c.l.b16 %v422
        %v737 = vunpack.c.h.b16 %v422
        %v738 = vunpack.c.l.b16 %v423
        %v739 = vunpack.c.h.b16 %v423
        %v740 = vunpack.c.l.b16 %v424
        %v741 = vunpack.c.h.b16 %v424
        %v742 = vunpack.c.l.b16 %v425
        %v743 = vunpack.c.h.b16 %v425
        %v744 = vunpack.c.l.b16 %v426
        %v745 = vunpack.c.h.b16 %v426
        %v746 = vunpack.c.l.b16 %v427
        %v747 = vunpack.c.h.b16 %v427
        %v748 = vunpack.c.l.b16 %v428
        %v749 = vunpack.c.h.b16 %v428
        %v750 = vunpack.c.l.b16 %v429
        %v751 = vunpack.c.h.b16 %v429
        %v752 = vunpack.c.l.b16 %v430
        %v753 = vunpack.c.h.b16 %v430
        %v754 = vunpack.c.l.b16 %v431
        %v755 = vunpack.c.h.b16 %v431
        %v756 = vunpack.c.l.b16 %v432
        %v757 = vunpack.c.h.b16 %v432
        %v758 = vunpack.c.l.b16 %v433
        %v759 = vunpack.c.h.b16 %v433
        %v760 = vunpack.c.l.b16 %v434
        %v761 = vunpack.c.h.b16 %v434
        %v762 = vunpack.c.l.b16 %v435
        %v763 = vunpack.c.h.b16 %v435
        %v764 = vunpack.c.l.b16 %v436
        %v765 = vunpack.c.h.b16 %v436
        %v766 = vunpack.c.l.b16 %v437
        %v767 = vunpack.c.h.b16 %v437
        %v768 = vunpack.c.l.b16 %v438
        %v769 = vunpack.c.h.b16 %v438
        %v770 = vunpack.c.l.b16 %v439
        %v771 = vunpack.c.h.b16 %v439
        %v772 = vunpack.c.l.b16 %v440
        %v773 = vunpack.c.h.b16 %v440
        %v774 = vunpack.c.l.b16 %v441
        %v775 = vunpack.c.h.b16 %v441
        %v776 = vunpack.c.l.b16 %v442
        %v777 = vunpack.c.h.b16 %v442
        %v778 = vunpack.c.l.b16 %v443
        %v779 = vunpack.c.h.b16 %v443
        %v780 = vunpack.c.l.b16 %v444
        %v781 = vunpack.c.h.b16 %v444
        %v782 = vunpack.c.l.b16 %v445
        %v783 = vunpack.c.h.b16 %v445
        %v784 = vunpack.c.l.b16 %v446
        %v785 = vunpack.c.h.b16 %v446
        %v786 = vunpack.c.l.b16 %v447
        %v787 = vunpack.c.h.b16 %v447
        %v788 = vunpack.c.l.b16 %v448
        %v789 = vunpack.c.h.b16 %v448
        %v790 = vunpack.c.l.b16 %v449
        %v791 = vunpack.c.h.b16 %v449
        %v792 = vunpack.c.l.b16 %v450
        %v793 = vunpack.c.h.b16 %v450
        %v794 = vunpack.c.l.b16 %v451
        %v795 = vunpack.c.h.b16 %v451
        %v796 = vunpack.c.l.b16 %v452
        %v797 = vunpack.c.h.b16 %v452
        %v798 = vunpack.c.l.b16 %v453
        %v799 = vunpack.c.h.b16 %v453
        %v800 = vunpack.c.l.b16 %v454
        %v801 = vunpack.c.h.b16 %v454
        %v802 = vunpack.c.l.b16 %v455
        %v803 = vunpack.c.h.b16 %v455
        %v804 = vunpack.c.l.b16 %v456
        %v805 = vunpack.c.h.b16 %v456
        %v806 = vunpack.c.l.b16 %v457
        %v807 = vunpack.c.h.b16 %v457
        %v808 = vunpack.c.l.b16 %v458
        %v809 = vunpack.c.h.b16 %v458
        %v810 = vunpack.c.l.b16 %v459
        %v811 = vunpack.c.h.b16 %v459
        %v812 = vunpack.c.l.b16 %v460
        %v813 = vunpack.c.h.b16 %v460
        %v814 = vunpack.c.l.b16 %v461
        %v815 = vunpack.c.h.b16 %v461
        %v816 = vunpack.c.l.b16 %v462
        %v817 = vunpack.c.h.b16 %v462
        %v818 = vunpack.c.l.b16 %v463
        %v819 = vunpack.c.h.b16 %v463
        %v820 = vunpack.c.l.b16 %v464
        %v821 = vunpack.c.h.b16 %v464
        %v822 = vunpack.c.l.b16 %v465
        %v823 = vunpack.c.h.b16 %v465
        %v824 = vunpack.c.l.b16 %v466
        %v825 = vunpack.c.h.b16 %v466
        %v826 = vunpack.c.l.b16 %v467
        %v827 = vunpack.c.h.b16 %v467
        %v828 = vunpack.c.l.b16 %v468
        %v829 = vunpack.c.h.b16 %v468
        %v830 = vunpack.c.l.b16 %v469
        %v831 = vunpack.c.h.b16 %v469
        %v832 = vunpack.c.l.b16 %v470
        %v833 = vunpack.c.h.b16 %v470
        %v834 = vunpack.c.l.b16 %v471
        %v835 = vunpack.c.h.b16 %v471
        %v836 = vunpack.c.l.b16 %v472
        %v837 = vunpack.c.h.b16 %v472
        %v838 = vunpack.c.l.b16 %v473
        %v839 = vunpack.c.h.b16 %v473
        %v840 = vunpack.c.l.b16 %v474
        %v841 = vunpack.c.h.b16 %v474
        %v842 = vunpack.c.l.b16 %v475
        %v843 = vunpack.c.h.b16 %v475
        %v844 = vunpack.c.l.b16 %v476
        %v845 = vunpack.c.h.b16 %v476
        %v846 = vunpack.c.l.b16 %v477
        %v847 = vunpack.c.h.b16 %v477
        %v848 = vunpack.c.l.b16 %v478
        %v849 = vunpack.c.h.b16 %v478
        %v850 = vunpack.c.l.b16 %v479
        %v851 = vunpack.c.h.b16 %v479
        %v852 = vunpack.c.l.b16 %v480
        %v853 = vunpack.c.h.b16 %v480
        %v854 = vunpack.c.l.b16 %v481
        %v855 = vunpack.c.h.b16 %v481
        %v856 = vunpack.c.l.b16 %v482
        %v857 = vunpack.c.h.b16 %v482
        %v858 = vunpack.c.l.b16 %v483
        %v859 = vunpack.c.h.b16 %v483
        %v860 = vunpack.c.l.b16 %v484
        %v861 = vunpack.c.h.b16 %v484
        %v862 = vunpack.c.l.b16 %v485
        %v863 = vunpack.c.h.b16 %v485
        %v864 = vunpack.c.l.b16 %v486
        %v865 = vunpack.c.h.b16 %v486
        %v866 = vunpack.c.l.b16 %v487
        %v867 = vunpack.c.h.b16 %v487
        %v868 = vunpack.c.l.b16 %v488
        %v869 = vunpack.c.h.b16 %v488
        %v870 = vunpack.c.l.b16 %v489
        %v871 = vunpack.c.h.b16 %v489
        %v872 = vunpack.c.l.b16 %v490
        %v873 = vunpack.c.h.b16 %v490
        %v874 = vunpack.c.l.b16 %v491
        %v875 = vunpack.c.h.b16 %v491
        %v876 = vunpack.c.l.b16 %v492
        %v877 = vunpack.c.h.b16 %v492
        %v878 = vunpack.c.l.b16 %v493
        %v879 = vunpack.c.h.b16 %v493
        %v880 = vunpack.c.l.b16 %v494
        %v881 = vunpack.c.h.b16 %v494
        %v882 = vunpack.c.l.b16 %v495
        %v883 = vunpack.c.h.b16 %v495
        %v884 = vunpack.c.l.b16 %v496
        %v885 = vunpack.c.h.b16 %v496
        %v886 = vunpack.c.l.b16 %v497
        %v887 = vunpack.c.h.b16 %v497
        %v888 = vunpack.c.l.b16 %v498
        %v889 = vunpack.c.h.b16 %v498
        %v890 = vunpack.c.l.b16 %v499
        %v891 = vunpack.c.h.b16 %v499
        %v892 = vunpack.c.l.b16 %v500
        %v893 = vunpack.c.h.b16 %v500
        %v894 = vunpack.c.l.b16 %v501
        %v895 = vunpack.c.h.b16 %v501
        %v896 = vunpack.c.l.b16 %v502
        %v897 = vunpack.c.h.b16 %v502
        %v898 = vunpack.c.l.b16 %v503
        %v899 = vunpack.c.h.b16 %v503
        %v900 = vunpack.c.l.b16 %v504
        %v901 = vunpack.c.h.b16 %v504
        %v902 = vunpack.c.l.b16 %v505
        %v903 = vunpack.c.h.b16 %v505
        %v904 = vunpack.c.l.b16 %v506
        %v905 = vunpack.c.h.b16 %v506
        %v906 = vunpack.c.l.b16 %v507
        %v907 = vunpack.c.h.b16 %v507
        %v908 = vunpack.c.l.b16 %v508
        %v909 = vunpack.c.h.b16 %v508
        %v910 = vunpack.c.l.b16 %v509
        %v911 = vunpack.c.h.b16 %v509
        %v912 = vunpack.c.l.b16 %v510
        %v913 = vunpack.c.h.b16 %v510
        %v914 = vunpack.c.l.b16 %v511
        %v915 = vunpack.c.h.b16 %v511
        %v916 = vunpack.c.l.b16 %v512
        %v917 = vunpack.c.h.b16 %v512
        %v918 = vunpack.c.l.b16 %v513
        %v919 = vunpack.c.h.b16 %v513
        %v920 = vpack.c.b16 %v668, %v664
        %v921 = vpack.c.b16 %v669, %v665
        %v922 = vpack.c.b16 %v670, %v666
        %v923 = vpack.c.b16 %v671, %v667
        %v924 = vpack.c.b16 %v676, %v672
        %v925 = vpack.c.b16 %v677, %v673
        %v926 = vpack.c.b16 %v678, %v674
        %v927 = vpack.c.b16 %v679, %v675
        %v928 = vpack.c.b16 %v684, %v680
        %v929 = vpack.c.b16 %v685, %v681
        %v930 = vpack.c.b16 %v686, %v682
        %v931 = vpack.c.b16 %v687, %v683
        %v932 = vpack.c.b16 %v692, %v688
        %v933 = vpack.c.b16 %v693, %v689
        %v934 = vpack.c.b16 %v694, %v690
        %v935 = vpack.c.b16 %v695, %v691
        %v936 = vpack.c.b16 %v700, %v696
        %v937 = vpack.c.b16 %v701, %v697
        %v938 = vpack.c.b16 %v702, %v698
        %v939 = vpack.c.b16 %v703, %v699
        %v940 = vpack.c.b16 %v708, %v704
        %v941 = vpack.c.b16 %v709, %v705
        %v942 = vpack.c.b16 %v710, %v706
        %v943 = vpack.c.b16 %v711, %v707
        %v944 = vpack.c.b16 %v716, %v712
        %v945 = vpack.c.b16 %v717, %v713
        %v946 = vpack.c.b16 %v718, %v714
        %v947 = vpack.c.b16 %v719, %v715
        %v948 = vpack.c.b16 %v724, %v720
        %v949 = vpack.c.b16 %v725, %v721
        %v950 = vpack.c.b16 %v726, %v722
        %v951 = vpack.c.b16 %v727, %v723
        %v952 = vpack.c.b16 %v732, %v728
        %v953 = vpack.c.b16 %v733, %v729
        %v954 = vpack.c.b16 %v734, %v730
        %v955 = vpack.c.b16 %v735, %v731
        %v956 = vpack.c.b16 %v740, %v736
        %v957 = vpack.c.b16 %v741, %v737
        %v958 = vpack.c.b16 %v742, %v738
        %v959 = vpack.c.b16 %v743, %v739
        %v960 = vpack.c.b16 %v748, %v744
        %v961 = vpack.c.b16 %v749, %v745
        %v962 = vpack.c.b16 %v750, %v746
        %v963 = vpack.c.b16 %v751, %v747
        %v964 = vpack.c.b16 %v756, %v752
        %v965 = vpack.c.b16 %v757, %v753
        %v966 = vpack.c.b16 %v758, %v754
        %v967 = vpack.c.b16 %v759, %v755
        %v968 = vpack.c.b16 %v764, %v760
        %v969 = vpack.c.b16 %v765, %v761
        %v970 = vpack.c.b16 %v766, %v762
        %v971 = vpack.c.b16 %v767, %v763
        %v972 = vpack.c.b16 %v772, %v768
        %v973 = vpack.c.b16 %v773, %v769
        %v974 = vpack.c.b16 %v774, %v770
        %v975 = vpack.c.b16 %v775, %v771
        %v976 = vpack.c.b16 %v780, %v776
        %v977 = vpack.c.b16 %v781, %v777
        %v978 = vpack.c.b16 %v782, %v778
        %v979 = vpack.c.b16 %v783, %v779
        %v980 = vpack.c.b16 %v788, %v784
        %v981 = vpack.c.b16 %v789, %v785
        %v982 = vpack.c.b16 %v790, %v786
        %v983 = vpack.c.b16 %v791, %v787
        %v984 = vpack.c.b16 %v796, %v792
        %v985 = vpack.c.b16 %v797, %v793
        %v986 = vpack.c.b16 %v798, %v794
        %v987 = vpack.c.b16 %v799, %v795
        %v988 = vpack.c.b16 %v804, %v800
        %v989 = vpack.c.b16 %v805, %v801
        %v990 = vpack.c.b16 %v806, %v802
        %v991 = vpack.c.b16 %v807, %v803
        %v992 = vpack.c.b16 %v812, %v808
        %v993 = vpack.c.b16 %v813, %v809
        %v994 = vpack.c.b16 %v814, %v810
        %v995 = vpack.c.b16 %v815, %v811
        %v996 = vpack.c.b16 %v820, %v816
        %v997 = vpack.c.b16 %v821, %v817
        %v998 = vpack.c.b16 %v822, %v818
        %v999 = vpack.c.b16 %v823, %v819
        %v1000 = vpack.c.b16 %v828, %v824
        %v1001 = vpack.c.b16 %v829, %v825
        %v1002 = vpack.c.b16 %v830, %v826
        %v1003 = vpack.c.b16 %v831, %v827
        %v1004 = vpack.c.b16 %v836, %v832
        %v1005 = vpack.c.b16 %v837, %v833
        %v1006 = vpack.c.b16 %v838, %v834
        %v1007 = vpack.c.b16 %v839, %v835
        %v1008 = vpack.c.b16 %v844, %v840
        %v1009 = vpack.c.b16 %v845, %v841
        %v1010 = vpack.c.b16 %v846, %v842
        %v1011 = vpack.c.b16 %v847, %v843
        %v1012 = vpack.c.b16 %v852, %v848
        %v1013 = vpack.c.b16 %v853, %v849
        %v1014 = vpack.c.b16 %v854, %v850
        %v1015 = vpack.c.b16 %v855, %v851
        %v1016 = vpack.c.b16 %v860, %v856
        %v1017 = vpack.c.b16 %v861, %v857
        %v1018 = vpack.c.b16 %v862, %v858
        %v1019 = vpack.c.b16 %v863, %v859
        %v1020 = vpack.c.b16 %v868, %v864
        %v1021 = vpack.c.b16 %v869, %v865
        %v1022 = vpack.c.b16 %v870, %v866
        %v1023 = vpack.c.b16 %v871, %v867
        %v1024 = vpack.c.b16 %v876, %v872
        %v1025 = vpack.c.b16 %v877, %v873
        %v1026 = vpack.c.b16 %v878, %v874
        %v1027 = vpack.c.b16 %v879, %v875
        %v1028 = vpack.c.b16 %v884, %v880
        %v1029 = vpack.c.b16 %v885, %v881
        %v1030 = vpack.c.b16 %v886, %v882
        %v1031 = vpack.c.b16 %v887, %v883
        %v1032 = vpack.c.b16 %v892, %v888
        %v1033 = vpack.c.b16 %v893, %v889
        %v1034 = vpack.c.b16 %v894, %v890
        %v1035 = vpack.c.b16 %v895, %v891
        %v1036 = vpack.c.b16 %v900, %v896
        %v1037 = vpack.c.b16 %v901, %v897
        %v1038 = vpack.c.b16 %v902, %v898
        %v1039 = vpack.c.b16 %v903, %v899
        %v1040 = vpack.c.b16 %v908, %v904
        %v1041 = vpack.c.b16 %v909, %v905
        %v1042 = vpack.c.b16 %v910, %v906
        %v1043 = vpack.c.b16 %v911, %v907
        %v1044 = vpack.c.b16 %v916, %v912
        %v1045 = vpack.c.b16 %v917, %v913
        %v1046 = vpack.c.b16 %v918, %v914
        %v1047 = vpack.c.b16 %v919, %v915
        %1176 = vmatprep.subr.bf16.mxu0 %v949
        %1177 = vmatpush1.bf16.msra.mxu0 %v948
        %1178 = vmatprep.subr.bf16.mxu0 %v945
        %1179 = vmatpush1.bf16.msra.mxu0 %v944
        %1180 = vmatprep.subr.bf16.mxu0 %v941
        %1181 = vmatpush1.bf16.msra.mxu0 %v940
        %1182 = vmatprep.subr.bf16.mxu0 %v937
        %1183 = vmatpush1.bf16.msra.mxu0 %v936
        %1184 = vmatprep.subr.bf16.mxu0 %v933
        %1185 = vmatpush1.bf16.msra.mxu0 %v932
        %1186 = vmatprep.subr.bf16.mxu0 %v929
        %1187 = vmatpush1.bf16.msra.mxu0 %v928
        %1188 = vmatprep.subr.bf16.mxu0 %v925
        %1189 = vmatpush1.bf16.msra.mxu0 %v924
        %1190 = vmatprep.subr.bf16.mxu0 %v921
        %1191 = vmatpush1.bf16.msra.mxu0 %v920
        %1192 = vmatprep.subr.bf16.mxu0 %v981
        %1193 = vmatpush2.bf16.msra.mxu0 %v980
        %1194 = vmatprep.subr.bf16.mxu0 %v977
        %1195 = vmatpush2.bf16.msra.mxu0 %v976
        %1196 = vmatprep.subr.bf16.mxu0 %v973
        %1197 = vmatpush2.bf16.msra.mxu0 %v972
        %1198 = vmatprep.subr.bf16.mxu0 %v969
        %1199 = vmatpush2.bf16.msra.mxu0 %v968
        %1200 = vmatprep.subr.bf16.mxu0 %v965
        %1201 = vmatpush2.bf16.msra.mxu0 %v964
        %1202 = vmatprep.subr.bf16.mxu0 %v961
        %1203 = vmatpush2.bf16.msra.mxu0 %v960
        %1204 = vmatprep.subr.bf16.mxu0 %v957
        %1205 = vmatpush2.bf16.msra.mxu0 %v956
        %1206 = vmatprep.subr.bf16.mxu0 %v953
        %1207 = vmatpush2.bf16.msra.mxu0 %v952
        %1208 = vmatprep.mubr.bf16.mxu0 %v371
        %1209 = vmatmul.mubr.bf16.gmra.mxu0 %v370
        %v1210 = vpop.f32.mrf.mxu0
        %v1211 = vadd.f32 %v519, %v1210
        %v1212 = vpop.f32.mrf.mxu0
        %v1213 = vadd.f32 %v523, %v1212
        %v1214 = vpop.f32.mrf.mxu0
        %v1215 = vadd.f32 %v519, %v1214
        %v1216 = vpop.f32.mrf.mxu0
        %v1217 = vadd.f32 %v523, %v1216
        %1218 = vmatprep.mubr.bf16.mxu0 %v375
        %1219 = vmatmul.mubr.bf16.gmra.mxu0 %v374
        %v1220 = vpop.f32.mrf.mxu0
        %v1221 = vadd.f32 %v519, %v1220
        %v1222 = vpop.f32.mrf.mxu0
        %v1223 = vadd.f32 %v523, %v1222
        %v1224 = vpop.f32.mrf.mxu0
        %v1225 = vadd.f32 %v519, %v1224
        %v1226 = vpop.f32.mrf.mxu0
        %v1227 = vadd.f32 %v523, %v1226
        %1228 = vmatprep.mubr.bf16.mxu0 %v379
        %1229 = vmatmul.mubr.bf16.gmra.mxu0 %v378
        %v1230 = vpop.f32.mrf.mxu0
        %v1231 = vadd.f32 %v519, %v1230
        %v1232 = vpop.f32.mrf.mxu0
        %v1233 = vadd.f32 %v523, %v1232
        %v1234 = vpop.f32.mrf.mxu0
        %v1235 = vadd.f32 %v519, %v1234
        %v1236 = vpop.f32.mrf.mxu0
        %v1237 = vadd.f32 %v523, %v1236
        %1238 = vmatprep.mubr.bf16.mxu0 %v383
        %1239 = vmatmul.mubr.bf16.gmra.mxu0 %v382
        %v1240 = vpop.f32.mrf.mxu0
        %v1241 = vadd.f32 %v519, %v1240
        %v1242 = vpop.f32.mrf.mxu0
        %v1243 = vadd.f32 %v523, %v1242
        %v1244 = vpop.f32.mrf.mxu0
        %v1245 = vadd.f32 %v519, %v1244
        %v1246 = vpop.f32.mrf.mxu0
        %v1247 = vadd.f32 %v523, %v1246
        %1248 = vdwg.mxu0
        %1249 = vmatprep.subr.bf16.mxu0 %v1013
        %1250 = vmatpush1.bf16.msra.mxu0 %v1012
        %1251 = vmatprep.subr.bf16.mxu0 %v1009
        %1252 = vmatpush1.bf16.msra.mxu0 %v1008
        %1253 = vmatprep.subr.bf16.mxu0 %v1005
        %1254 = vmatpush1.bf16.msra.mxu0 %v1004
        %1255 = vmatprep.subr.bf16.mxu0 %v1001
        %1256 = vmatpush1.bf16.msra.mxu0 %v1000
        %1257 = vmatprep.subr.bf16.mxu0 %v997
        %1258 = vmatpush1.bf16.msra.mxu0 %v996
        %1259 = vmatprep.subr.bf16.mxu0 %v993
        %1260 = vmatpush1.bf16.msra.mxu0 %v992
        %1261 = vmatprep.subr.bf16.mxu0 %v989
        %1262 = vmatpush1.bf16.msra.mxu0 %v988
        %1263 = vmatprep.subr.bf16.mxu0 %v985
        %1264 = vmatpush1.bf16.msra.mxu0 %v984
        %1265 = vmatprep.subr.bf16.mxu0 %v1045
        %1266 = vmatpush2.bf16.msra.mxu0 %v1044
        %1267 = vmatprep.subr.bf16.mxu0 %v1041
        %1268 = vmatpush2.bf16.msra.mxu0 %v1040
        %1269 = vmatprep.subr.bf16.mxu0 %v1037
        %1270 = vmatpush2.bf16.msra.mxu0 %v1036
        %1271 = vmatprep.subr.bf16.mxu0 %v1033
        %1272 = vmatpush2.bf16.msra.mxu0 %v1032
        %1273 = vmatprep.subr.bf16.mxu0 %v1029
        %1274 = vmatpush2.bf16.msra.mxu0 %v1028
        %1275 = vmatprep.subr.bf16.mxu0 %v1025
        %1276 = vmatpush2.bf16.msra.mxu0 %v1024
        %1277 = vmatprep.subr.bf16.mxu0 %v1021
        %1278 = vmatpush2.bf16.msra.mxu0 %v1020
        %1279 = vmatprep.subr.bf16.mxu0 %v1017
        %1280 = vmatpush2.bf16.msra.mxu0 %v1016
        %1281 = vmatprep.mubr.bf16.mxu0 %v373
        %1282 = vmatmul.mubr.bf16.gmra.mxu0 %v372
        %v1283 = vpop.f32.mrf.mxu0
        %v1284 = vadd.f32 %v1211, %v1283
        %v1285 = vpop.f32.mrf.mxu0
        %v1286 = vadd.f32 %v1213, %v1285
        %v1287 = vpop.f32.mrf.mxu0
        %v1288 = vadd.f32 %v1215, %v1287
        %v1289 = vpop.f32.mrf.mxu0
        %v1290 = vadd.f32 %v1217, %v1289
        %1291 = vmatprep.mubr.bf16.mxu0 %v377
        %1292 = vmatmul.mubr.bf16.gmra.mxu0 %v376
        %v1293 = vpop.f32.mrf.mxu0
        %v1294 = vadd.f32 %v1221, %v1293
        %v1295 = vpop.f32.mrf.mxu0
        %v1296 = vadd.f32 %v1223, %v1295
        %v1297 = vpop.f32.mrf.mxu0
        %v1298 = vadd.f32 %v1225, %v1297
        %v1299 = vpop.f32.mrf.mxu0
        %v1300 = vadd.f32 %v1227, %v1299
        %1301 = vmatprep.mubr.bf16.mxu0 %v381
        %1302 = vmatmul.mubr.bf16.gmra.mxu0 %v380
        %v1303 = vpop.f32.mrf.mxu0
        %v1304 = vadd.f32 %v1231, %v1303
        %v1305 = vpop.f32.mrf.mxu0
        %v1306 = vadd.f32 %v1233, %v1305
        %v1307 = vpop.f32.mrf.mxu0
        %v1308 = vadd.f32 %v1235, %v1307
        %v1309 = vpop.f32.mrf.mxu0
        %v1310 = vadd.f32 %v1237, %v1309
        %1311 = vmatprep.mubr.bf16.mxu0 %v385
        %1312 = vmatmul.mubr.bf16.gmra.mxu0 %v384
        %v1313 = vpop.f32.mrf.mxu0
        %v1314 = vadd.f32 %v1241, %v1313
        %v1315 = vpop.f32.mrf.mxu0
        %v1316 = vadd.f32 %v1243, %v1315
        %v1317 = vpop.f32.mrf.mxu0
        %v1318 = vadd.f32 %v1245, %v1317
        %v1319 = vpop.f32.mrf.mxu0
        %v1320 = vadd.f32 %v1247, %v1319
        %1321 = vdwg.mxu0
        %1322 = vmatprep.subr.bf16.mxu0 %v951
        %1323 = vmatpush1.bf16.msra.mxu0 %v950
        %1324 = vmatprep.subr.bf16.mxu0 %v947
        %1325 = vmatpush1.bf16.msra.mxu0 %v946
        %1326 = vmatprep.subr.bf16.mxu0 %v943
        %1327 = vmatpush1.bf16.msra.mxu0 %v942
        %1328 = vmatprep.subr.bf16.mxu0 %v939
        %1329 = vmatpush1.bf16.msra.mxu0 %v938
        %1330 = vmatprep.subr.bf16.mxu0 %v935
        %1331 = vmatpush1.bf16.msra.mxu0 %v934
        %1332 = vmatprep.subr.bf16.mxu0 %v931
        %1333 = vmatpush1.bf16.msra.mxu0 %v930
        %1334 = vmatprep.subr.bf16.mxu0 %v927
        %1335 = vmatpush1.bf16.msra.mxu0 %v926
        %1336 = vmatprep.subr.bf16.mxu0 %v923
        %1337 = vmatpush1.bf16.msra.mxu0 %v922
        %1338 = vmatprep.subr.bf16.mxu0 %v983
        %1339 = vmatpush2.bf16.msra.mxu0 %v982
        %1340 = vmatprep.subr.bf16.mxu0 %v979
        %1341 = vmatpush2.bf16.msra.mxu0 %v978
        %1342 = vmatprep.subr.bf16.mxu0 %v975
        %1343 = vmatpush2.bf16.msra.mxu0 %v974
        %1344 = vmatprep.subr.bf16.mxu0 %v971
        %1345 = vmatpush2.bf16.msra.mxu0 %v970
        %1346 = vmatprep.subr.bf16.mxu0 %v967
        %1347 = vmatpush2.bf16.msra.mxu0 %v966
        %1348 = vmatprep.subr.bf16.mxu0 %v963
        %1349 = vmatpush2.bf16.msra.mxu0 %v962
        %1350 = vmatprep.subr.bf16.mxu0 %v959
        %1351 = vmatpush2.bf16.msra.mxu0 %v958
        %1352 = vmatprep.subr.bf16.mxu0 %v955
        %1353 = vmatpush2.bf16.msra.mxu0 %v954
        %1354 = vmatprep.mubr.bf16.mxu0 %v371
        %1355 = vmatmul.mubr.bf16.gmra.mxu0 %v370
        %v1356 = vpop.f32.mrf.mxu0
        %v1357 = vadd.f32 %v527, %v1356
        %v1358 = vpop.f32.mrf.mxu0
        %v1359 = vadd.f32 %v531, %v1358
        %v1360 = vpop.f32.mrf.mxu0
        %v1361 = vadd.f32 %v527, %v1360
        %v1362 = vpop.f32.mrf.mxu0
        %v1363 = vadd.f32 %v531, %v1362
        %1364 = vmatprep.mubr.bf16.mxu0 %v375
        %1365 = vmatmul.mubr.bf16.gmra.mxu0 %v374
        %v1366 = vpop.f32.mrf.mxu0
        %v1367 = vadd.f32 %v527, %v1366
        %v1368 = vpop.f32.mrf.mxu0
        %v1369 = vadd.f32 %v531, %v1368
        %v1370 = vpop.f32.mrf.mxu0
        %v1371 = vadd.f32 %v527, %v1370
        %v1372 = vpop.f32.mrf.mxu0
        %v1373 = vadd.f32 %v531, %v1372
        %1374 = vmatprep.mubr.bf16.mxu0 %v379
        %1375 = vmatmul.mubr.bf16.gmra.mxu0 %v378
        %v1376 = vpop.f32.mrf.mxu0
        %v1377 = vadd.f32 %v527, %v1376
        %v1378 = vpop.f32.mrf.mxu0
        %v1379 = vadd.f32 %v531, %v1378
        %v1380 = vpop.f32.mrf.mxu0
        %v1381 = vadd.f32 %v527, %v1380
        %v1382 = vpop.f32.mrf.mxu0
        %v1383 = vadd.f32 %v531, %v1382
        %1384 = vmatprep.mubr.bf16.mxu0 %v383
        %1385 = vmatmul.mubr.bf16.gmra.mxu0 %v382
        %v1386 = vpop.f32.mrf.mxu0
        %v1387 = vadd.f32 %v527, %v1386
        %v1388 = vpop.f32.mrf.mxu0
        %v1389 = vadd.f32 %v531, %v1388
        %v1390 = vpop.f32.mrf.mxu0
        %v1391 = vadd.f32 %v527, %v1390
        %v1392 = vpop.f32.mrf.mxu0
        %v1393 = vadd.f32 %v531, %v1392
        %1394 = vdwg.mxu0
        %1395 = vmatprep.subr.bf16.mxu0 %v1015
        %1396 = vmatpush1.bf16.msra.mxu0 %v1014
        %1397 = vmatprep.subr.bf16.mxu0 %v1011
        %1398 = vmatpush1.bf16.msra.mxu0 %v1010
        %1399 = vmatprep.subr.bf16.mxu0 %v1007
        %1400 = vmatpush1.bf16.msra.mxu0 %v1006
        %1401 = vmatprep.subr.bf16.mxu0 %v1003
        %1402 = vmatpush1.bf16.msra.mxu0 %v1002
        %1403 = vmatprep.subr.bf16.mxu0 %v999
        %1404 = vmatpush1.bf16.msra.mxu0 %v998
        %1405 = vmatprep.subr.bf16.mxu0 %v995
        %1406 = vmatpush1.bf16.msra.mxu0 %v994
        %1407 = vmatprep.subr.bf16.mxu0 %v991
        %1408 = vmatpush1.bf16.msra.mxu0 %v990
        %1409 = vmatprep.subr.bf16.mxu0 %v987
        %1410 = vmatpush1.bf16.msra.mxu0 %v986
        %1411 = vmatprep.subr.bf16.mxu0 %v1047
        %1412 = vmatpush2.bf16.msra.mxu0 %v1046
        %1413 = vmatprep.subr.bf16.mxu0 %v1043
        %1414 = vmatpush2.bf16.msra.mxu0 %v1042
        %1415 = vmatprep.subr.bf16.mxu0 %v1039
        %1416 = vmatpush2.bf16.msra.mxu0 %v1038
        %1417 = vmatprep.subr.bf16.mxu0 %v1035
        %1418 = vmatpush2.bf16.msra.mxu0 %v1034
        %1419 = vmatprep.subr.bf16.mxu0 %v1031
        %1420 = vmatpush2.bf16.msra.mxu0 %v1030
        %1421 = vmatprep.subr.bf16.mxu0 %v1027
        %1422 = vmatpush2.bf16.msra.mxu0 %v1026
        %1423 = vmatprep.subr.bf16.mxu0 %v1023
        %1424 = vmatpush2.bf16.msra.mxu0 %v1022
        %1425 = vmatprep.subr.bf16.mxu0 %v1019
        %1426 = vmatpush2.bf16.msra.mxu0 %v1018
        %1427 = vmatprep.mubr.bf16.mxu0 %v373
        %1428 = vmatmul.mubr.bf16.gmra.mxu0 %v372
        %v1429 = vpop.f32.mrf.mxu0
        %v1430 = vadd.f32 %v1357, %v1429
        %v1431 = vpop.f32.mrf.mxu0
        %v1432 = vadd.f32 %v1359, %v1431
        %v1433 = vpop.f32.mrf.mxu0
        %v1434 = vadd.f32 %v1361, %v1433
        %v1435 = vpop.f32.mrf.mxu0
        %v1436 = vadd.f32 %v1363, %v1435
        %1437 = vmatprep.mubr.bf16.mxu0 %v377
        %1438 = vmatmul.mubr.bf16.gmra.mxu0 %v376
        %v1439 = vpop.f32.mrf.mxu0
        %v1440 = vadd.f32 %v1367, %v1439
        %v1441 = vpop.f32.mrf.mxu0
        %v1442 = vadd.f32 %v1369, %v1441
        %v1443 = vpop.f32.mrf.mxu0
        %v1444 = vadd.f32 %v1371, %v1443
        %v1445 = vpop.f32.mrf.mxu0
        %v1446 = vadd.f32 %v1373, %v1445
        %1447 = vmatprep.mubr.bf16.mxu0 %v381
        %1448 = vmatmul.mubr.bf16.gmra.mxu0 %v380
        %v1449 = vpop.f32.mrf.mxu0
        %v1450 = vadd.f32 %v1377, %v1449
        %v1451 = vpop.f32.mrf.mxu0
        %v1452 = vadd.f32 %v1379, %v1451
        %v1453 = vpop.f32.mrf.mxu0
        %v1454 = vadd.f32 %v1381, %v1453
        %v1455 = vpop.f32.mrf.mxu0
        %v1456 = vadd.f32 %v1383, %v1455
        %1457 = vmatprep.mubr.bf16.mxu0 %v385
        %1458 = vmatmul.mubr.bf16.gmra.mxu0 %v384
        %v1459 = vpop.f32.mrf.mxu0
        %v1460 = vadd.f32 %v1387, %v1459
        %v1461 = vpop.f32.mrf.mxu0
        %v1462 = vadd.f32 %v1389, %v1461
        %v1463 = vpop.f32.mrf.mxu0
        %v1464 = vadd.f32 %v1391, %v1463
        %v1465 = vpop.f32.mrf.mxu0
        %v1466 = vadd.f32 %v1393, %v1465
        %1467 = vdwg.mxu0
        %v1468 = vmax.f32 %v1284, 0.0
        %v1469 = vmax.f32 %v1286, 0.0
        %v1470 = vmax.f32 %v1430, 0.0
        %v1471 = vmax.f32 %v1432, 0.0
        %v1472 = vmax.f32 %v1288, 0.0
        %v1473 = vmax.f32 %v1290, 0.0
        %v1474 = vmax.f32 %v1434, 0.0
        %v1475 = vmax.f32 %v1436, 0.0
        %v1476 = vmax.f32 %v1294, 0.0
        %v1477 = vmax.f32 %v1296, 0.0
        %v1478 = vmax.f32 %v1440, 0.0
        %v1479 = vmax.f32 %v1442, 0.0
        %v1480 = vmax.f32 %v1298, 0.0
        %v1481 = vmax.f32 %v1300, 0.0
        %v1482 = vmax.f32 %v1444, 0.0
        %v1483 = vmax.f32 %v1446, 0.0
        %v1484 = vmax.f32 %v1304, 0.0
        %v1485 = vmax.f32 %v1306, 0.0
        %v1486 = vmax.f32 %v1450, 0.0
        %v1487 = vmax.f32 %v1452, 0.0
        %v1488 = vmax.f32 %v1308, 0.0
        %v1489 = vmax.f32 %v1310, 0.0
        %v1490 = vmax.f32 %v1454, 0.0
        %v1491 = vmax.f32 %v1456, 0.0
        %v1492 = vmax.f32 %v1314, 0.0
        %v1493 = vmax.f32 %v1316, 0.0
        %v1494 = vmax.f32 %v1460, 0.0
        %v1495 = vmax.f32 %v1462, 0.0
        %v1496 = vmax.f32 %v1318, 0.0
        %v1497 = vmax.f32 %v1320, 0.0
        %v1498 = vmax.f32 %v1464, 0.0
        %v1499 = vmax.f32 %v1466, 0.0
        %s1500 = smul.u32 %s19, 32
        %v1501 = vlaneseq
        %v1502 = vshrl.u32 %v1501, 7
        %v1503 = vadd.s32 %v1502, 8
        %v1504 = vadd.s32 %v1502, 16
        %v1505 = vadd.s32 %v1502, 24
        %v1506 = vstv %s1500
        %v1507 = vadd.s32 %v1506, %v1502
        %v1508 = vadd.s32 %v1506, %v1503
        %v1509 = vadd.s32 %v1506, %v1504
        %v1510 = vadd.s32 %v1506, %v1505
        %vm1511 = vcmp.lt.s32.totalorder %v1507, 72
        %vm1512 = vcmp.lt.s32.totalorder %v1508, 72
        %vm1513 = vcmp.lt.s32.totalorder %v1509, 72
        %vm1514 = vcmp.lt.s32.totalorder %v1510, 72
        %v1515 = vsel %vm1511, %v1468, 0.0
        %v1516 = vsel %vm1511, %v1469, 0.0
        %v1517 = vsel %vm1511, %v1470, 0.0
        %v1518 = vsel %vm1511, %v1471, 0.0
        %v1519 = vsel %vm1512, %v1472, 0.0
        %v1520 = vsel %vm1512, %v1473, 0.0
        %v1521 = vsel %vm1512, %v1474, 0.0
        %v1522 = vsel %vm1512, %v1475, 0.0
        %v1523 = vsel %vm1513, %v1476, 0.0
        %v1524 = vsel %vm1513, %v1477, 0.0
        %v1525 = vsel %vm1513, %v1478, 0.0
        %v1526 = vsel %vm1513, %v1479, 0.0
        %v1527 = vsel %vm1514, %v1480, 0.0
        %v1528 = vsel %vm1514, %v1481, 0.0
        %v1529 = vsel %vm1514, %v1482, 0.0
        %v1530 = vsel %vm1514, %v1483, 0.0
        %v1531 = vsel %vm1511, %v1484, 0.0
        %v1532 = vsel %vm1511, %v1485, 0.0
        %v1533 = vsel %vm1511, %v1486, 0.0
        %v1534 = vsel %vm1511, %v1487, 0.0
        %v1535 = vsel %vm1512, %v1488, 0.0
        %v1536 = vsel %vm1512, %v1489, 0.0
        %v1537 = vsel %vm1512, %v1490, 0.0
        %v1538 = vsel %vm1512, %v1491, 0.0
        %v1539 = vsel %vm1513, %v1492, 0.0
        %v1540 = vsel %vm1513, %v1493, 0.0
        %v1541 = vsel %vm1513, %v1494, 0.0
        %v1542 = vsel %vm1513, %v1495, 0.0
        %v1543 = vsel %vm1514, %v1496, 0.0
        %v1544 = vsel %vm1514, %v1497, 0.0
        %v1545 = vsel %vm1514, %v1498, 0.0
        %v1546 = vsel %vm1514, %v1499, 0.0
        %v1547 = vld [vmem:[%s332] sm:$0xff]
        %v1548 = vadd.f32 %v1515, %v1519
        %v1549 = vadd.f32 %v1548, %v1523
        %v1550 = vadd.f32 %v1549, %v1527
        %v1551 = vrot.slane %v1550, 4
        %v1552 = vadd.f32 %v1550, %v1551
        %v1553 = vrot.slane %v1552, 2
        %v1554 = vadd.f32 %v1552, %v1553
        %v1555 = vrot.slane %v1554, 1
        %v1556 = vadd.f32 %v1554, %v1555
        %v1557 = vadd.f32 %v1516, %v1520
        %v1558 = vadd.f32 %v1557, %v1524
        %v1559 = vadd.f32 %v1558, %v1528
        %v1560 = vrot.slane %v1559, 4
        %v1561 = vadd.f32 %v1559, %v1560
        %v1562 = vrot.slane %v1561, 2
        %v1563 = vadd.f32 %v1561, %v1562
        %v1564 = vrot.slane %v1563, 1
        %v1565 = vadd.f32 %v1563, %v1564
        %v1566 = vadd.f32 %v1517, %v1521
        %v1567 = vadd.f32 %v1566, %v1525
        %v1568 = vadd.f32 %v1567, %v1529
        %v1569 = vrot.slane %v1568, 4
        %v1570 = vadd.f32 %v1568, %v1569
        %v1571 = vrot.slane %v1570, 2
        %v1572 = vadd.f32 %v1570, %v1571
        %v1573 = vrot.slane %v1572, 1
        %v1574 = vadd.f32 %v1572, %v1573
        %v1575 = vadd.f32 %v1518, %v1522
        %v1576 = vadd.f32 %v1575, %v1526
        %v1577 = vadd.f32 %v1576, %v1530
        %v1578 = vrot.slane %v1577, 4
        %v1579 = vadd.f32 %v1577, %v1578
        %v1580 = vrot.slane %v1579, 2
        %v1581 = vadd.f32 %v1579, %v1580
        %v1582 = vrot.slane %v1581, 1
        %v1583 = vadd.f32 %v1581, %v1582
        %v1584 = vadd.f32 %v1531, %v1535
        %v1585 = vadd.f32 %v1584, %v1539
        %v1586 = vadd.f32 %v1585, %v1543
        %v1587 = vrot.slane %v1586, 4
        %v1588 = vadd.f32 %v1586, %v1587
        %v1589 = vrot.slane %v1588, 2
        %v1590 = vadd.f32 %v1588, %v1589
        %v1591 = vrot.slane %v1590, 1
        %v1592 = vadd.f32 %v1590, %v1591
        %v1593 = vadd.f32 %v1532, %v1536
        %v1594 = vadd.f32 %v1593, %v1540
        %v1595 = vadd.f32 %v1594, %v1544
        %v1596 = vrot.slane %v1595, 4
        %v1597 = vadd.f32 %v1595, %v1596
        %v1598 = vrot.slane %v1597, 2
        %v1599 = vadd.f32 %v1597, %v1598
        %v1600 = vrot.slane %v1599, 1
        %v1601 = vadd.f32 %v1599, %v1600
        %v1602 = vadd.f32 %v1533, %v1537
        %v1603 = vadd.f32 %v1602, %v1541
        %v1604 = vadd.f32 %v1603, %v1545
        %v1605 = vrot.slane %v1604, 4
        %v1606 = vadd.f32 %v1604, %v1605
        %v1607 = vrot.slane %v1606, 2
        %v1608 = vadd.f32 %v1606, %v1607
        %v1609 = vrot.slane %v1608, 1
        %v1610 = vadd.f32 %v1608, %v1609
        %v1611 = vadd.f32 %v1534, %v1538
        %v1612 = vadd.f32 %v1611, %v1542
        %v1613 = vadd.f32 %v1612, %v1546
        %v1614 = vrot.slane %v1613, 4
        %v1615 = vadd.f32 %v1613, %v1614
        %v1616 = vrot.slane %v1615, 2
        %v1617 = vadd.f32 %v1615, %v1616
        %v1618 = vrot.slane %v1617, 1
        %v1619 = vadd.f32 %v1617, %v1618
        %v1628 = vcombine.low %v1556, %v1565
        %v1629 = vcombine.low %v1574, %v1583
        %v1631 = vunpack.c.l.s4 1983009808
        %v1632 = vunpack.c.0.s8 %v1631
        %v1633 = vlaneseq
        %v1634 = vshrl.u32 %v1633, 7
        %v1635 = vsub.s32 %v1632, %v1634
        %v1636 = vrot.slane %v1628, %v1635
        %v1638 = vunpack.c.l.s4 1983009808
        %v1639 = vunpack.c.0.s8 %v1638
        %v1640 = vlaneseq
        %v1641 = vshrl.u32 %v1640, 7
        %v1642 = vsub.s32 %v1639, %v1641
        %v1643 = vrot.slane %v1629, %v1642
        %v1644 = vcombine.low %v1636, %v1643
        %v1645 = vcombine.low %v1592, %v1601
        %v1646 = vcombine.low %v1610, %v1619
        %v1648 = vunpack.c.l.s4 1983009808
        %v1649 = vunpack.c.0.s8 %v1648
        %v1650 = vlaneseq
        %v1651 = vshrl.u32 %v1650, 7
        %v1652 = vsub.s32 %v1649, %v1651
        %v1653 = vrot.slane %v1645, %v1652
        %v1655 = vunpack.c.l.s4 1983009808
        %v1656 = vunpack.c.0.s8 %v1655
        %v1657 = vlaneseq
        %v1658 = vshrl.u32 %v1657, 7
        %v1659 = vsub.s32 %v1656, %v1658
        %v1660 = vrot.slane %v1646, %v1659
        %v1661 = vcombine.low %v1653, %v1660
        %vm1662 = vcmask 1044484
        %v1663 = vsel %vm1662, %v1644, %v1644
        %vm1664 = vcmask 1046534
        %v1665 = vsel %vm1664, %v1644, %v1663
        %v1666 = vrot.slane %v1661, 7
        %vm1667 = vcmask 1041409
        %v1668 = vsel %vm1667, %v1666, %v1665
        %vm1669 = vcmask 1043459
        %v1670 = vsel %vm1669, %v1666, %v1668
        %vm1671 = vcmask 1045509
        %v1672 = vsel %vm1671, %v1666, %v1670
        %vm1673 = vcmask 1047559
        %v1674 = vsel %vm1673, %v1666, %v1672
        %v1676 = vadd.f32 %v1547, %v1674
        %1677 = vst [vmem:[%s332] sm:$0xff] %v1676
        %p1678 = scmp.eq.s32.totalorder %s19, 2
        // Predicated region
        $region67: #{mean_mil_forward.1} parent=57 // pred_check
          %p1679 = pneg %p1678
        $region68: #{mean_mil_forward.1} parent=57 // pred_check_branch
          %1681 = sbr.rel (%p1679) target = $region70
        $region69: #{mean_mil_forward.1} parent=57 // pred_region
          %v1682 = vld [vmem:[%s332] sm:$0xff]
          %v1683 = vmul.f32 %v1682, 0.013888889
          %1684 = vst [vmem:[%s332] sm:$0xff] %v1683
        $region70: #{mean_mil_forward.1} parent=57 // pred_fallthru
          _
        %p1685 = scmp.lt.s32.totalorder %s18, 0
        %s1686 = scalar_select %p1685, %s18, 0
        %s1687 = smul.addr %s1686, 4
        %s1688 = smul.addr %s1687, 2
        %s1689 = scalar_lea.vmem %s3, %s1688
        // Predicated region
        $region71: #{mean_mil_forward.1} parent=57 // pred_check
          %p1690 = pneg %p114
        $region72: #{mean_mil_forward.1} parent=57 // pred_check_branch
          %1692 = sbr.rel (%p1690) target = $region74
        $region73: #{mean_mil_forward.1} parent=57 // pred_region
          _
        $region74: #{mean_mil_forward.1} parent=57 // pred_fallthru
          _
        // Predicated region
        $region75: #{mean_mil_forward.1} parent=57 // pred_check
          %p1693 = pneg %p114
        $region76: #{mean_mil_forward.1} parent=57 // pred_check_branch
          %1695 = sbr.rel (%p1693) target = $region78
        $region77: #{mean_mil_forward.1} parent=57 // pred_region
          %p1696 = scmp.lt.s32.totalorder %s18, 0
          %s1697 = scalar_select %p1696, %s18, 0
          %s1698 = smul.addr %s1697, 4
          %s1699 = smul.addr %s1698, 2
          %s1700 = scalar_lea.vmem %s3, %s1699
        $region78: #{mean_mil_forward.1} parent=57 // pred_fallthru
          _
      $region58: #{mean_mil_forward.1} parent=5 // pred_fallthru
        _
      %p1701 = scmp.le.s32.totalorder 2, %s9
      // Predicated region
      $region79: #{mean_mil_forward.1} parent=5 // pred_check
        %p1702 = pneg %p1701
      $region80: #{mean_mil_forward.1} parent=5 // pred_check_branch
        %1704 = sbr.rel (%p1702) target = $region82
      $region81: #{mean_mil_forward.1} parent=5 // pred_region
        %s1705 = ssub.s32 %s9, 2
      $region82: #{mean_mil_forward.1} parent=5 // pred_fallthru
        _
    $region6: #{mean_mil_forward.1} parent=1 // loop_footer
      %s13 = sadd.s32 1, %s9
    $region7: #{mean_mil_forward.1} parent=1 // loop_footer_branch
      %8 = sbr.rel target = $region3
    $region8: #{mean_mil_forward.1} parent=1 // loop_exit
      _

</llo_original>
